<compile_context>
chip_gen: v7x
topology: tpu7x:2x2x1
jax: 0.10.0
libtpu: 0.0.40
codegen_flags: <defaults>
</compile_context>

<pallas_src>
import functools

import numpy as np

import jax
import jax.numpy as jnp
from jax.experimental import pallas as pl
from jax.experimental.pallas import tpu as pltpu


def _fused_resblock_kernel(x_ref, w1_ref, b_ref, w2_ref, m_ref, out_ref, *, K, W, p):
    """Fused conv(+bias,ReLU) -> conv_transpose -> x - 2*(.) for `nb` images.

    x_ref:   (nb, C, HW)      input block, channel-major, spatial on lanes
    w1_ref:  (K*K, inner, C)  forward-conv per-tap weights
    b_ref:   (inner, 1)       bias (broadcast over lanes)
    w2_ref:  (K*K, C, inner)  transpose-conv (flipped, channel-swapped) taps
    m_ref:   (K*K, 1, HW)     per-tap 0/1 zero-padding boundary masks
    out_ref: (nb, C, HW)      output block (same layout as input)
    """
    nb, C, HW = x_ref.shape
    inner = w1_ref.shape[1]

    def shift_cols(v, s):
        # r[:, k] = v[:, k + s] wherever k + s is in range; zero fill elsewhere.
        # The per-tap mask independently zeroes every out-of-image position
        # (including row wrap-around), so only in-range values matter here.
        if s == 0:
            return v
        pad = jnp.zeros((v.shape[0], abs(s)), jnp.float32)
        if s > 0:
            return jnp.concatenate([v[:, s:], pad], axis=1)
        return jnp.concatenate([pad, v[:, :HW + s]], axis=1)

    for n in range(nb):
        x = x_ref[n].astype(jnp.float32)                         # (C, HW)

        # ---- stage 1: conv + bias + ReLU, per-tap MXU accumulation ----------
        acc1 = jnp.zeros((inner, HW), jnp.float32)
        for di in range(K):
            for dj in range(K):
                tap = di * K + dj
                s = (di - p) * W + (dj - p)
                xs = shift_cols(x, s) * m_ref[tap]               # (C, HW)
                acc1 = acc1 + jnp.dot(w1_ref[tap].astype(jnp.float32), xs,
                                      preferred_element_type=jnp.float32)
        act = jnp.maximum(acc1 + b_ref[...].astype(jnp.float32), 0.0)  # (inner, HW)

        # ---- stage 2: conv_transpose2d == SAME correlation w/ flipped taps ---
        acc2 = jnp.zeros((C, HW), jnp.float32)
        for di in range(K):
            for dj in range(K):
                tap = di * K + dj
                s = (di - p) * W + (dj - p)
                rs = shift_cols(act, s) * m_ref[tap]             # (inner, HW)
                acc2 = acc2 + jnp.dot(w2_ref[tap].astype(jnp.float32), rs,
                                      preferred_element_type=jnp.float32)

        # ---- residual: out = x - 2 * conv_transpose(relu(conv(x) + b)) ------
        out_ref[n] = (x - 2.0 * acc2).astype(out_ref.dtype)


def _tile_padded_bytes(shape, itemsize=4, sublane=8, lane=128):
    """(8,128)-tiling-aware byte count: round lane dim to 128, sublane dim to 8."""
    if not shape:
        return itemsize
    dims = list(shape)
    dims[-1] = -(-dims[-1] // lane) * lane
    if len(dims) >= 2:
        dims[-2] = -(-dims[-2] // sublane) * sublane
    n = 1
    for d in dims:
        n *= d
    return n * itemsize


def _vmem_bytes_estimate(nb, C, inner, HW, K):
    blk_io = 2 * 2 * _tile_padded_bytes((nb, C, HW))           # x + out, double-buffered
    weights = (_tile_padded_bytes((K * K, inner, C))
               + _tile_padded_bytes((inner, 1))
               + _tile_padded_bytes((K * K, C, inner))
               + _tile_padded_bytes((K * K, 1, HW)))
    # live temporaries inside one step (accumulators, activation, shifted taps)
    live = nb * 8 * (_tile_padded_bytes((inner, HW)) + _tile_padded_bytes((C, HW)))
    return blk_io + weights + live


def _pick_images_per_step(N, C, inner, HW, K, budget_bytes):
    best = 1
    for nb in range(1, N + 1):
        if N % nb:
            continue
        if N >= 2 and N // nb < 2:
            continue  # keep >= 2 grid steps so both v7x TensorCores are used
        if _vmem_bytes_estimate(nb, C, inner, HW, K) <= budget_bytes:
            best = nb
    return best


def aoc_lipschitz_resblock_forward(x_nchw, weight, bias, *, kernel_size,
                                   images_per_step=None):
    """x: (N, C, H, W); weight: (inner, C, K, K); bias: (inner,). Returns NCHW."""
    K = kernel_size
    if K % 2 != 1:
        raise NotImplementedError("odd kernel_size only (even K changes spatial dims)")
    p = K // 2
    N, C, H, W = x_nchw.shape
    inner = weight.shape[0]
    HW = H * W

    # Free reshape only (no HBM transpose passes): NCHW -> (N, C, H*W).
    x = x_nchw.reshape(N, C, HW)

    # Per-tap weights. Forward conv tap: w1[di*K+dj, m, c] = W[m, c, di, dj].
    w1 = jnp.transpose(weight, (2, 3, 0, 1)).reshape(K * K, inner, C)
    # Transpose conv as a SAME correlation with the spatially flipped,
    # channel-swapped kernel: w2[di*K+dj, c, m] = W[m, c, K-1-di, K-1-dj].
    wflip = weight[:, :, ::-1, ::-1]
    w2 = jnp.transpose(wflip, (2, 3, 1, 0)).reshape(K * K, C, inner)
    b = bias.reshape(inner, 1)

    # Static per-tap zero-padding masks over the flattened spatial axis.
    yy, xx = np.divmod(np.arange(HW, dtype=np.int64), W)
    masks = np.zeros((K * K, 1, HW), np.float32)
    for di in range(K):
        for dj in range(K):
            sy, sx = di - p, dj - p
            ok = (yy + sy >= 0) & (yy + sy < H) & (xx + sx >= 0) & (xx + sx < W)
            masks[di * K + dj, 0] = ok.astype(np.float32)
    masks = jnp.asarray(masks)

    # Generation-aware VMEM budget (v7x: 64 MiB/TC, v5e/v6e: 128 MiB).
    try:
        vmem_capacity = int(pltpu.get_tpu_info().vmem_capacity_bytes)
    except Exception:
        vmem_capacity = 64 * 1024 * 1024  # conservative (v7x) fallback
    budget = vmem_capacity // 8
    nb = images_per_step if images_per_step is not None else _pick_images_per_step(
        N, C, inner, HW, K, budget)
    if N % nb != 0:
        raise ValueError("images_per_step must divide the batch size")
    vmem_limit = int(min(vmem_capacity // 2,
                         max(16 * 1024 * 1024,
                             4 * _vmem_bytes_estimate(nb, C, inner, HW, K))))

    out = pl.pallas_call(
        functools.partial(_fused_resblock_kernel, K=K, W=W, p=p),
        out_shape=jax.ShapeDtypeStruct((N, C, HW), x.dtype),
        grid=(N // nb,),
        in_specs=[
            pl.BlockSpec((nb, C, HW), lambda i: (i, 0, 0)),
            pl.BlockSpec((K * K, inner, C), lambda i: (0, 0, 0)),
            pl.BlockSpec((inner, 1), lambda i: (0, 0)),
            pl.BlockSpec((K * K, C, inner), lambda i: (0, 0, 0)),
            pl.BlockSpec((K * K, 1, HW), lambda i: (0, 0, 0)),
        ],
        out_specs=pl.BlockSpec((nb, C, HW), lambda i: (i, 0, 0)),
        compiler_params=pltpu.CompilerParams(
            dimension_semantics=("parallel",),
            vmem_limit_bytes=vmem_limit,
        ),
    )(x, w1, b, w2, masks)

    return out.reshape(N, C, H, W)


def _reference_forward(x_nchw, weight, bias, kernel_size):
    """Pure-JAX reference: conv2d + relu, then the adjoint (conv_transpose) via VJP."""
    p = kernel_size // 2
    conv = lambda z: jax.lax.conv_general_dilated(
        z, weight, (1, 1), [(p, p), (p, p)],
        dimension_numbers=("NCHW", "OIHW", "NCHW"))
    res = jnp.maximum(conv(x_nchw) + bias[None, :, None, None], 0.0)
    _, vjp = jax.vjp(conv, x_nchw)
    (tres,) = vjp(res)   # == F.conv_transpose2d(res, weight, padding=p)
    return x_nchw - 2.0 * tres


if __name__ == "__main__":
    # Module config: in_channels=4, inner_dim_factor=2 -> inner_dim=8,
    # kernel_size=3, padding_mode='zeros', groups=1, bias=True.
    N, C, H, W = 2, 4, 16, 16
    inner_dim_factor = 2
    inner_dim = C * inner_dim_factor
    K = 3

    key = jax.random.PRNGKey(0)
    kx, kw, kb = jax.random.split(key, 3)
    x = jax.random.normal(kx, (N, C, H, W), dtype=jnp.float32)
    weight = 0.1 * jax.random.normal(kw, (inner_dim, C, K, K), dtype=jnp.float32)
    bias = 0.05 * jax.random.normal(kb, (inner_dim,), dtype=jnp.float32)

    out = aoc_lipschitz_resblock_forward(x, weight, bias, kernel_size=K)
    out = jax.block_until_ready(out)

    ref = _reference_forward(x, weight, bias, K)
    assert out.shape == (N, C, H, W)
    max_err = float(jnp.max(jnp.abs(out - ref)))
    assert jnp.allclose(out, ref, atol=1e-4, rtol=1e-4), max_err

    print("KERNEL_OK")
</pallas_src>

<mosaic_0001>
module attributes {stable_mosaic.version = 11 : i64} {
  func.func @_fused_resblock_kernel(%arg0: i32, %arg1: memref<1x4x256xf32, #tpu.memory_space<vmem>>, %arg2: memref<9x8x4xf32, #tpu.memory_space<vmem>>, %arg3: memref<8x1xf32, #tpu.memory_space<vmem>>, %arg4: memref<9x4x8xf32, #tpu.memory_space<vmem>>, %arg5: memref<9x1x256xf32, #tpu.memory_space<vmem>>, %arg6: memref<1x4x256xf32, #tpu.memory_space<vmem>>) attributes {dimension_semantics = [#tpu.dimension_semantics<parallel>], iteration_bounds = array<i64: 2>, scalar_prefetch = 0 : i64, scratch_operands = 0 : i64, tpu.core_type = #tpu.core_type<tc>, window_params = [{transform_indices = @transform_0, window_bounds = array<i64: 1, 4, 256>}, {pipeline_mode = #tpu.pipeline_mode<synchronous>, transform_indices = @transform_1, window_bounds = array<i64: 9, 8, 4>}, {pipeline_mode = #tpu.pipeline_mode<synchronous>, transform_indices = @transform_2, window_bounds = array<i64: 8, 1>}, {pipeline_mode = #tpu.pipeline_mode<synchronous>, transform_indices = @transform_3, window_bounds = array<i64: 9, 4, 8>}, {pipeline_mode = #tpu.pipeline_mode<synchronous>, transform_indices = @transform_4, window_bounds = array<i64: 9, 1, 256>}, {transform_indices = @transform_5, window_bounds = array<i64: 1, 4, 256>}]} {
    %c0 = arith.constant 0 : index
    %c0_0 = arith.constant 0 : index
    %c0_1 = arith.constant 0 : index
    %0 = vector.load %arg1[%c0, %c0_0, %c0_1] : memref<1x4x256xf32, #tpu.memory_space<vmem>>, vector<1x4x256xf32>
    %1 = vector.shape_cast %0 : vector<1x4x256xf32> to vector<4x256xf32>
    %cst = arith.constant 0.000000e+00 : f32
    %2 = vector.broadcast %cst : f32 to vector<8x256xf32>
    %cst_2 = arith.constant 0.000000e+00 : f32
    %3 = vector.broadcast %cst_2 : f32 to vector<4x17xf32>
    %4 = vector.extract_strided_slice %1 {offsets = [0, 0], sizes = [4, 239], strides = [1, 1]} : vector<4x256xf32> to vector<4x239xf32>
    %5 = tpu.concatenate %3, %4 in 1 : vector<4x17xf32>, vector<4x239xf32> -> vector<4x256xf32>
    %c0_3 = arith.constant 0 : index
    %c0_4 = arith.constant 0 : index
    %c0_5 = arith.constant 0 : index
    %6 = vector.load %arg5[%c0_3, %c0_4, %c0_5] : memref<9x1x256xf32, #tpu.memory_space<vmem>>, vector<1x1x256xf32>
    %7 = vector.shape_cast %6 : vector<1x1x256xf32> to vector<1x256xf32>
    %8 = vector.broadcast %7 : vector<1x256xf32> to vector<4x256xf32>
    %9 = arith.mulf %5, %8 : vector<4x256xf32>
    %c0_6 = arith.constant 0 : index
    %c0_7 = arith.constant 0 : index
    %c0_8 = arith.constant 0 : index
    %10 = vector.load %arg2[%c0_6, %c0_7, %c0_8] : memref<9x8x4xf32, #tpu.memory_space<vmem>>, vector<1x8x4xf32>
    %11 = vector.shape_cast %10 : vector<1x8x4xf32> to vector<8x4xf32>
    %cst_9 = arith.constant dense<0.000000e+00> : vector<8x256xf32>
    %12 = tpu.matmul %11, %9, %cst_9 {dimension_numbers = #tpu.dot_dimension_numbers<[1], [0], [0], [1], [0, 0, 1, 1], [], []>} : vector<8x4xf32>, vector<4x256xf32>, vector<8x256xf32> -> vector<8x256xf32>
    %13 = arith.addf %2, %12 : vector<8x256xf32>
    %cst_10 = arith.constant 0.000000e+00 : f32
    %14 = vector.broadcast %cst_10 : f32 to vector<4x16xf32>
    %15 = vector.extract_strided_slice %1 {offsets = [0, 0], sizes = [4, 240], strides = [1, 1]} : vector<4x256xf32> to vector<4x240xf32>
    %16 = tpu.concatenate %14, %15 in 1 : vector<4x16xf32>, vector<4x240xf32> -> vector<4x256xf32>
    %c1 = arith.constant 1 : index
    %c0_11 = arith.constant 0 : index
    %c0_12 = arith.constant 0 : index
    %17 = vector.load %arg5[%c1, %c0_11, %c0_12] : memref<9x1x256xf32, #tpu.memory_space<vmem>>, vector<1x1x256xf32>
    %18 = vector.shape_cast %17 : vector<1x1x256xf32> to vector<1x256xf32>
    %19 = vector.broadcast %18 : vector<1x256xf32> to vector<4x256xf32>
    %20 = arith.mulf %16, %19 : vector<4x256xf32>
    %c1_13 = arith.constant 1 : index
    %c0_14 = arith.constant 0 : index
    %c0_15 = arith.constant 0 : index
    %21 = vector.load %arg2[%c1_13, %c0_14, %c0_15] : memref<9x8x4xf32, #tpu.memory_space<vmem>>, vector<1x8x4xf32>
    %22 = vector.shape_cast %21 : vector<1x8x4xf32> to vector<8x4xf32>
    %cst_16 = arith.constant dense<0.000000e+00> : vector<8x256xf32>
    %23 = tpu.matmul %22, %20, %cst_16 {dimension_numbers = #tpu.dot_dimension_numbers<[1], [0], [0], [1], [0, 0, 1, 1], [], []>} : vector<8x4xf32>, vector<4x256xf32>, vector<8x256xf32> -> vector<8x256xf32>
    %24 = arith.addf %13, %23 : vector<8x256xf32>
    %cst_17 = arith.constant 0.000000e+00 : f32
    %25 = vector.broadcast %cst_17 : f32 to vector<4x15xf32>
    %26 = vector.extract_strided_slice %1 {offsets = [0, 0], sizes = [4, 241], strides = [1, 1]} : vector<4x256xf32> to vector<4x241xf32>
    %27 = tpu.concatenate %25, %26 in 1 : vector<4x15xf32>, vector<4x241xf32> -> vector<4x256xf32>
    %c2 = arith.constant 2 : index
    %c0_18 = arith.constant 0 : index
    %c0_19 = arith.constant 0 : index
    %28 = vector.load %arg5[%c2, %c0_18, %c0_19] : memref<9x1x256xf32, #tpu.memory_space<vmem>>, vector<1x1x256xf32>
    %29 = vector.shape_cast %28 : vector<1x1x256xf32> to vector<1x256xf32>
    %30 = vector.broadcast %29 : vector<1x256xf32> to vector<4x256xf32>
    %31 = arith.mulf %27, %30 : vector<4x256xf32>
    %c2_20 = arith.constant 2 : index
    %c0_21 = arith.constant 0 : index
    %c0_22 = arith.constant 0 : index
    %32 = vector.load %arg2[%c2_20, %c0_21, %c0_22] : memref<9x8x4xf32, #tpu.memory_space<vmem>>, vector<1x8x4xf32>
    %33 = vector.shape_cast %32 : vector<1x8x4xf32> to vector<8x4xf32>
    %cst_23 = arith.constant dense<0.000000e+00> : vector<8x256xf32>
    %34 = tpu.matmul %33, %31, %cst_23 {dimension_numbers = #tpu.dot_dimension_numbers<[1], [0], [0], [1], [0, 0, 1, 1], [], []>} : vector<8x4xf32>, vector<4x256xf32>, vector<8x256xf32> -> vector<8x256xf32>
    %35 = arith.addf %24, %34 : vector<8x256xf32>
    %cst_24 = arith.constant 0.000000e+00 : f32
    %36 = vector.broadcast %cst_24 : f32 to vector<4x1xf32>
    %37 = vector.extract_strided_slice %1 {offsets = [0, 0], sizes = [4, 255], strides = [1, 1]} : vector<4x256xf32> to vector<4x255xf32>
    %38 = tpu.concatenate %36, %37 in 1 : vector<4x1xf32>, vector<4x255xf32> -> vector<4x256xf32>
    %c3 = arith.constant 3 : index
    %c0_25 = arith.constant 0 : index
    %c0_26 = arith.constant 0 : index
    %39 = vector.load %arg5[%c3, %c0_25, %c0_26] : memref<9x1x256xf32, #tpu.memory_space<vmem>>, vector<1x1x256xf32>
    %40 = vector.shape_cast %39 : vector<1x1x256xf32> to vector<1x256xf32>
    %41 = vector.broadcast %40 : vector<1x256xf32> to vector<4x256xf32>
    %42 = arith.mulf %38, %41 : vector<4x256xf32>
    %c3_27 = arith.constant 3 : index
    %c0_28 = arith.constant 0 : index
    %c0_29 = arith.constant 0 : index
    %43 = vector.load %arg2[%c3_27, %c0_28, %c0_29] : memref<9x8x4xf32, #tpu.memory_space<vmem>>, vector<1x8x4xf32>
    %44 = vector.shape_cast %43 : vector<1x8x4xf32> to vector<8x4xf32>
    %cst_30 = arith.constant dense<0.000000e+00> : vector<8x256xf32>
    %45 = tpu.matmul %44, %42, %cst_30 {dimension_numbers = #tpu.dot_dimension_numbers<[1], [0], [0], [1], [0, 0, 1, 1], [], []>} : vector<8x4xf32>, vector<4x256xf32>, vector<8x256xf32> -> vector<8x256xf32>
    %46 = arith.addf %35, %45 : vector<8x256xf32>
    %c4 = arith.constant 4 : index
    %c0_31 = arith.constant 0 : index
    %c0_32 = arith.constant 0 : index
    %47 = vector.load %arg5[%c4, %c0_31, %c0_32] : memref<9x1x256xf32, #tpu.memory_space<vmem>>, vector<1x1x256xf32>
    %48 = vector.shape_cast %47 : vector<1x1x256xf32> to vector<1x256xf32>
    %49 = vector.broadcast %48 : vector<1x256xf32> to vector<4x256xf32>
    %50 = arith.mulf %1, %49 : vector<4x256xf32>
    %c4_33 = arith.constant 4 : index
    %c0_34 = arith.constant 0 : index
    %c0_35 = arith.constant 0 : index
    %51 = vector.load %arg2[%c4_33, %c0_34, %c0_35] : memref<9x8x4xf32, #tpu.memory_space<vmem>>, vector<1x8x4xf32>
    %52 = vector.shape_cast %51 : vector<1x8x4xf32> to vector<8x4xf32>
    %cst_36 = arith.constant dense<0.000000e+00> : vector<8x256xf32>
    %53 = tpu.matmul %52, %50, %cst_36 {dimension_numbers = #tpu.dot_dimension_numbers<[1], [0], [0], [1], [0, 0, 1, 1], [], []>} : vector<8x4xf32>, vector<4x256xf32>, vector<8x256xf32> -> vector<8x256xf32>
    %54 = arith.addf %46, %53 : vector<8x256xf32>
    %cst_37 = arith.constant 0.000000e+00 : f32
    %55 = vector.broadcast %cst_37 : f32 to vector<4x1xf32>
    %56 = vector.extract_strided_slice %1 {offsets = [0, 1], sizes = [4, 255], strides = [1, 1]} : vector<4x256xf32> to vector<4x255xf32>
    %57 = tpu.concatenate %56, %55 in 1 : vector<4x255xf32>, vector<4x1xf32> -> vector<4x256xf32>
    %c5 = arith.constant 5 : index
    %c0_38 = arith.constant 0 : index
    %c0_39 = arith.constant 0 : index
    %58 = vector.load %arg5[%c5, %c0_38, %c0_39] : memref<9x1x256xf32, #tpu.memory_space<vmem>>, vector<1x1x256xf32>
    %59 = vector.shape_cast %58 : vector<1x1x256xf32> to vector<1x256xf32>
    %60 = vector.broadcast %59 : vector<1x256xf32> to vector<4x256xf32>
    %61 = arith.mulf %57, %60 : vector<4x256xf32>
    %c5_40 = arith.constant 5 : index
    %c0_41 = arith.constant 0 : index
    %c0_42 = arith.constant 0 : index
    %62 = vector.load %arg2[%c5_40, %c0_41, %c0_42] : memref<9x8x4xf32, #tpu.memory_space<vmem>>, vector<1x8x4xf32>
    %63 = vector.shape_cast %62 : vector<1x8x4xf32> to vector<8x4xf32>
    %cst_43 = arith.constant dense<0.000000e+00> : vector<8x256xf32>
    %64 = tpu.matmul %63, %61, %cst_43 {dimension_numbers = #tpu.dot_dimension_numbers<[1], [0], [0], [1], [0, 0, 1, 1], [], []>} : vector<8x4xf32>, vector<4x256xf32>, vector<8x256xf32> -> vector<8x256xf32>
    %65 = arith.addf %54, %64 : vector<8x256xf32>
    %cst_44 = arith.constant 0.000000e+00 : f32
    %66 = vector.broadcast %cst_44 : f32 to vector<4x15xf32>
    %67 = vector.extract_strided_slice %1 {offsets = [0, 15], sizes = [4, 241], strides = [1, 1]} : vector<4x256xf32> to vector<4x241xf32>
    %68 = tpu.concatenate %67, %66 in 1 : vector<4x241xf32>, vector<4x15xf32> -> vector<4x256xf32>
    %c6 = arith.constant 6 : index
    %c0_45 = arith.constant 0 : index
    %c0_46 = arith.constant 0 : index
    %69 = vector.load %arg5[%c6, %c0_45, %c0_46] : memref<9x1x256xf32, #tpu.memory_space<vmem>>, vector<1x1x256xf32>
    %70 = vector.shape_cast %69 : vector<1x1x256xf32> to vector<1x256xf32>
    %71 = vector.broadcast %70 : vector<1x256xf32> to vector<4x256xf32>
    %72 = arith.mulf %68, %71 : vector<4x256xf32>
    %c6_47 = arith.constant 6 : index
    %c0_48 = arith.constant 0 : index
    %c0_49 = arith.constant 0 : index
    %73 = vector.load %arg2[%c6_47, %c0_48, %c0_49] : memref<9x8x4xf32, #tpu.memory_space<vmem>>, vector<1x8x4xf32>
    %74 = vector.shape_cast %73 : vector<1x8x4xf32> to vector<8x4xf32>
    %cst_50 = arith.constant dense<0.000000e+00> : vector<8x256xf32>
    %75 = tpu.matmul %74, %72, %cst_50 {dimension_numbers = #tpu.dot_dimension_numbers<[1], [0], [0], [1], [0, 0, 1, 1], [], []>} : vector<8x4xf32>, vector<4x256xf32>, vector<8x256xf32> -> vector<8x256xf32>
    %76 = arith.addf %65, %75 : vector<8x256xf32>
    %cst_51 = arith.constant 0.000000e+00 : f32
    %77 = vector.broadcast %cst_51 : f32 to vector<4x16xf32>
    %78 = vector.extract_strided_slice %1 {offsets = [0, 16], sizes = [4, 240], strides = [1, 1]} : vector<4x256xf32> to vector<4x240xf32>
    %79 = tpu.concatenate %78, %77 in 1 : vector<4x240xf32>, vector<4x16xf32> -> vector<4x256xf32>
    %c7 = arith.constant 7 : index
    %c0_52 = arith.constant 0 : index
    %c0_53 = arith.constant 0 : index
    %80 = vector.load %arg5[%c7, %c0_52, %c0_53] : memref<9x1x256xf32, #tpu.memory_space<vmem>>, vector<1x1x256xf32>
    %81 = vector.shape_cast %80 : vector<1x1x256xf32> to vector<1x256xf32>
    %82 = vector.broadcast %81 : vector<1x256xf32> to vector<4x256xf32>
    %83 = arith.mulf %79, %82 : vector<4x256xf32>
    %c7_54 = arith.constant 7 : index
    %c0_55 = arith.constant 0 : index
    %c0_56 = arith.constant 0 : index
    %84 = vector.load %arg2[%c7_54, %c0_55, %c0_56] : memref<9x8x4xf32, #tpu.memory_space<vmem>>, vector<1x8x4xf32>
    %85 = vector.shape_cast %84 : vector<1x8x4xf32> to vector<8x4xf32>
    %cst_57 = arith.constant dense<0.000000e+00> : vector<8x256xf32>
    %86 = tpu.matmul %85, %83, %cst_57 {dimension_numbers = #tpu.dot_dimension_numbers<[1], [0], [0], [1], [0, 0, 1, 1], [], []>} : vector<8x4xf32>, vector<4x256xf32>, vector<8x256xf32> -> vector<8x256xf32>
    %87 = arith.addf %76, %86 : vector<8x256xf32>
    %cst_58 = arith.constant 0.000000e+00 : f32
    %88 = vector.broadcast %cst_58 : f32 to vector<4x17xf32>
    %89 = vector.extract_strided_slice %1 {offsets = [0, 17], sizes = [4, 239], strides = [1, 1]} : vector<4x256xf32> to vector<4x239xf32>
    %90 = tpu.concatenate %89, %88 in 1 : vector<4x239xf32>, vector<4x17xf32> -> vector<4x256xf32>
    %c8 = arith.constant 8 : index
    %c0_59 = arith.constant 0 : index
    %c0_60 = arith.constant 0 : index
    %91 = vector.load %arg5[%c8, %c0_59, %c0_60] : memref<9x1x256xf32, #tpu.memory_space<vmem>>, vector<1x1x256xf32>
    %92 = vector.shape_cast %91 : vector<1x1x256xf32> to vector<1x256xf32>
    %93 = vector.broadcast %92 : vector<1x256xf32> to vector<4x256xf32>
    %94 = arith.mulf %90, %93 : vector<4x256xf32>
    %c8_61 = arith.constant 8 : index
    %c0_62 = arith.constant 0 : index
    %c0_63 = arith.constant 0 : index
    %95 = vector.load %arg2[%c8_61, %c0_62, %c0_63] : memref<9x8x4xf32, #tpu.memory_space<vmem>>, vector<1x8x4xf32>
    %96 = vector.shape_cast %95 : vector<1x8x4xf32> to vector<8x4xf32>
    %cst_64 = arith.constant dense<0.000000e+00> : vector<8x256xf32>
    %97 = tpu.matmul %96, %94, %cst_64 {dimension_numbers = #tpu.dot_dimension_numbers<[1], [0], [0], [1], [0, 0, 1, 1], [], []>} : vector<8x4xf32>, vector<4x256xf32>, vector<8x256xf32> -> vector<8x256xf32>
    %98 = arith.addf %87, %97 : vector<8x256xf32>
    %c0_65 = arith.constant 0 : index
    %c0_66 = arith.constant 0 : index
    %99 = vector.load %arg3[%c0_65, %c0_66] : memref<8x1xf32, #tpu.memory_space<vmem>>, vector<8x1xf32>
    %100 = vector.broadcast %99 : vector<8x1xf32> to vector<8x256xf32>
    %101 = arith.addf %98, %100 : vector<8x256xf32>
    %cst_67 = arith.constant 0.000000e+00 : f32
    %102 = vector.broadcast %cst_67 : f32 to vector<8x256xf32>
    %103 = arith.maximumf %101, %102 : vector<8x256xf32>
    %cst_68 = arith.constant 0.000000e+00 : f32
    %104 = vector.broadcast %cst_68 : f32 to vector<4x256xf32>
    %cst_69 = arith.constant 0.000000e+00 : f32
    %105 = vector.broadcast %cst_69 : f32 to vector<8x17xf32>
    %106 = vector.extract_strided_slice %103 {offsets = [0, 0], sizes = [8, 239], strides = [1, 1]} : vector<8x256xf32> to vector<8x239xf32>
    %107 = tpu.concatenate %105, %106 in 1 : vector<8x17xf32>, vector<8x239xf32> -> vector<8x256xf32>
    %c0_70 = arith.constant 0 : index
    %c0_71 = arith.constant 0 : index
    %c0_72 = arith.constant 0 : index
    %108 = vector.load %arg5[%c0_70, %c0_71, %c0_72] : memref<9x1x256xf32, #tpu.memory_space<vmem>>, vector<1x1x256xf32>
    %109 = vector.shape_cast %108 : vector<1x1x256xf32> to vector<1x256xf32>
    %110 = vector.broadcast %109 : vector<1x256xf32> to vector<8x256xf32>
    %111 = arith.mulf %107, %110 : vector<8x256xf32>
    %c0_73 = arith.constant 0 : index
    %c0_74 = arith.constant 0 : index
    %c0_75 = arith.constant 0 : index
    %112 = vector.load %arg4[%c0_73, %c0_74, %c0_75] : memref<9x4x8xf32, #tpu.memory_space<vmem>>, vector<1x4x8xf32>
    %113 = vector.shape_cast %112 : vector<1x4x8xf32> to vector<4x8xf32>
    %cst_76 = arith.constant dense<0.000000e+00> : vector<4x256xf32>
    %114 = tpu.matmul %113, %111, %cst_76 {dimension_numbers = #tpu.dot_dimension_numbers<[1], [0], [0], [1], [0, 0, 1, 1], [], []>} : vector<4x8xf32>, vector<8x256xf32>, vector<4x256xf32> -> vector<4x256xf32>
    %115 = arith.addf %104, %114 : vector<4x256xf32>
    %cst_77 = arith.constant 0.000000e+00 : f32
    %116 = vector.broadcast %cst_77 : f32 to vector<8x16xf32>
    %117 = vector.extract_strided_slice %103 {offsets = [0, 0], sizes = [8, 240], strides = [1, 1]} : vector<8x256xf32> to vector<8x240xf32>
    %118 = tpu.concatenate %116, %117 in 1 : vector<8x16xf32>, vector<8x240xf32> -> vector<8x256xf32>
    %c1_78 = arith.constant 1 : index
    %c0_79 = arith.constant 0 : index
    %c0_80 = arith.constant 0 : index
    %119 = vector.load %arg5[%c1_78, %c0_79, %c0_80] : memref<9x1x256xf32, #tpu.memory_space<vmem>>, vector<1x1x256xf32>
    %120 = vector.shape_cast %119 : vector<1x1x256xf32> to vector<1x256xf32>
    %121 = vector.broadcast %120 : vector<1x256xf32> to vector<8x256xf32>
    %122 = arith.mulf %118, %121 : vector<8x256xf32>
    %c1_81 = arith.constant 1 : index
    %c0_82 = arith.constant 0 : index
    %c0_83 = arith.constant 0 : index
    %123 = vector.load %arg4[%c1_81, %c0_82, %c0_83] : memref<9x4x8xf32, #tpu.memory_space<vmem>>, vector<1x4x8xf32>
    %124 = vector.shape_cast %123 : vector<1x4x8xf32> to vector<4x8xf32>
    %cst_84 = arith.constant dense<0.000000e+00> : vector<4x256xf32>
    %125 = tpu.matmul %124, %122, %cst_84 {dimension_numbers = #tpu.dot_dimension_numbers<[1], [0], [0], [1], [0, 0, 1, 1], [], []>} : vector<4x8xf32>, vector<8x256xf32>, vector<4x256xf32> -> vector<4x256xf32>
    %126 = arith.addf %115, %125 : vector<4x256xf32>
    %cst_85 = arith.constant 0.000000e+00 : f32
    %127 = vector.broadcast %cst_85 : f32 to vector<8x15xf32>
    %128 = vector.extract_strided_slice %103 {offsets = [0, 0], sizes = [8, 241], strides = [1, 1]} : vector<8x256xf32> to vector<8x241xf32>
    %129 = tpu.concatenate %127, %128 in 1 : vector<8x15xf32>, vector<8x241xf32> -> vector<8x256xf32>
    %c2_86 = arith.constant 2 : index
    %c0_87 = arith.constant 0 : index
    %c0_88 = arith.constant 0 : index
    %130 = vector.load %arg5[%c2_86, %c0_87, %c0_88] : memref<9x1x256xf32, #tpu.memory_space<vmem>>, vector<1x1x256xf32>
    %131 = vector.shape_cast %130 : vector<1x1x256xf32> to vector<1x256xf32>
    %132 = vector.broadcast %131 : vector<1x256xf32> to vector<8x256xf32>
    %133 = arith.mulf %129, %132 : vector<8x256xf32>
    %c2_89 = arith.constant 2 : index
    %c0_90 = arith.constant 0 : index
    %c0_91 = arith.constant 0 : index
    %134 = vector.load %arg4[%c2_89, %c0_90, %c0_91] : memref<9x4x8xf32, #tpu.memory_space<vmem>>, vector<1x4x8xf32>
    %135 = vector.shape_cast %134 : vector<1x4x8xf32> to vector<4x8xf32>
    %cst_92 = arith.constant dense<0.000000e+00> : vector<4x256xf32>
    %136 = tpu.matmul %135, %133, %cst_92 {dimension_numbers = #tpu.dot_dimension_numbers<[1], [0], [0], [1], [0, 0, 1, 1], [], []>} : vector<4x8xf32>, vector<8x256xf32>, vector<4x256xf32> -> vector<4x256xf32>
    %137 = arith.addf %126, %136 : vector<4x256xf32>
    %cst_93 = arith.constant 0.000000e+00 : f32
    %138 = vector.broadcast %cst_93 : f32 to vector<8x1xf32>
    %139 = vector.extract_strided_slice %103 {offsets = [0, 0], sizes = [8, 255], strides = [1, 1]} : vector<8x256xf32> to vector<8x255xf32>
    %140 = tpu.concatenate %138, %139 in 1 : vector<8x1xf32>, vector<8x255xf32> -> vector<8x256xf32>
    %c3_94 = arith.constant 3 : index
    %c0_95 = arith.constant 0 : index
    %c0_96 = arith.constant 0 : index
    %141 = vector.load %arg5[%c3_94, %c0_95, %c0_96] : memref<9x1x256xf32, #tpu.memory_space<vmem>>, vector<1x1x256xf32>
    %142 = vector.shape_cast %141 : vector<1x1x256xf32> to vector<1x256xf32>
    %143 = vector.broadcast %142 : vector<1x256xf32> to vector<8x256xf32>
    %144 = arith.mulf %140, %143 : vector<8x256xf32>
    %c3_97 = arith.constant 3 : index
    %c0_98 = arith.constant 0 : index
    %c0_99 = arith.constant 0 : index
    %145 = vector.load %arg4[%c3_97, %c0_98, %c0_99] : memref<9x4x8xf32, #tpu.memory_space<vmem>>, vector<1x4x8xf32>
    %146 = vector.shape_cast %145 : vector<1x4x8xf32> to vector<4x8xf32>
    %cst_100 = arith.constant dense<0.000000e+00> : vector<4x256xf32>
    %147 = tpu.matmul %146, %144, %cst_100 {dimension_numbers = #tpu.dot_dimension_numbers<[1], [0], [0], [1], [0, 0, 1, 1], [], []>} : vector<4x8xf32>, vector<8x256xf32>, vector<4x256xf32> -> vector<4x256xf32>
    %148 = arith.addf %137, %147 : vector<4x256xf32>
    %c4_101 = arith.constant 4 : index
    %c0_102 = arith.constant 0 : index
    %c0_103 = arith.constant 0 : index
    %149 = vector.load %arg5[%c4_101, %c0_102, %c0_103] : memref<9x1x256xf32, #tpu.memory_space<vmem>>, vector<1x1x256xf32>
    %150 = vector.shape_cast %149 : vector<1x1x256xf32> to vector<1x256xf32>
    %151 = vector.broadcast %150 : vector<1x256xf32> to vector<8x256xf32>
    %152 = arith.mulf %103, %151 : vector<8x256xf32>
    %c4_104 = arith.constant 4 : index
    %c0_105 = arith.constant 0 : index
    %c0_106 = arith.constant 0 : index
    %153 = vector.load %arg4[%c4_104, %c0_105, %c0_106] : memref<9x4x8xf32, #tpu.memory_space<vmem>>, vector<1x4x8xf32>
    %154 = vector.shape_cast %153 : vector<1x4x8xf32> to vector<4x8xf32>
    %cst_107 = arith.constant dense<0.000000e+00> : vector<4x256xf32>
    %155 = tpu.matmul %154, %152, %cst_107 {dimension_numbers = #tpu.dot_dimension_numbers<[1], [0], [0], [1], [0, 0, 1, 1], [], []>} : vector<4x8xf32>, vector<8x256xf32>, vector<4x256xf32> -> vector<4x256xf32>
    %156 = arith.addf %148, %155 : vector<4x256xf32>
    %cst_108 = arith.constant 0.000000e+00 : f32
    %157 = vector.broadcast %cst_108 : f32 to vector<8x1xf32>
    %158 = vector.extract_strided_slice %103 {offsets = [0, 1], sizes = [8, 255], strides = [1, 1]} : vector<8x256xf32> to vector<8x255xf32>
    %159 = tpu.concatenate %158, %157 in 1 : vector<8x255xf32>, vector<8x1xf32> -> vector<8x256xf32>
    %c5_109 = arith.constant 5 : index
    %c0_110 = arith.constant 0 : index
    %c0_111 = arith.constant 0 : index
    %160 = vector.load %arg5[%c5_109, %c0_110, %c0_111] : memref<9x1x256xf32, #tpu.memory_space<vmem>>, vector<1x1x256xf32>
    %161 = vector.shape_cast %160 : vector<1x1x256xf32> to vector<1x256xf32>
    %162 = vector.broadcast %161 : vector<1x256xf32> to vector<8x256xf32>
    %163 = arith.mulf %159, %162 : vector<8x256xf32>
    %c5_112 = arith.constant 5 : index
    %c0_113 = arith.constant 0 : index
    %c0_114 = arith.constant 0 : index
    %164 = vector.load %arg4[%c5_112, %c0_113, %c0_114] : memref<9x4x8xf32, #tpu.memory_space<vmem>>, vector<1x4x8xf32>
    %165 = vector.shape_cast %164 : vector<1x4x8xf32> to vector<4x8xf32>
    %cst_115 = arith.constant dense<0.000000e+00> : vector<4x256xf32>
    %166 = tpu.matmul %165, %163, %cst_115 {dimension_numbers = #tpu.dot_dimension_numbers<[1], [0], [0], [1], [0, 0, 1, 1], [], []>} : vector<4x8xf32>, vector<8x256xf32>, vector<4x256xf32> -> vector<4x256xf32>
    %167 = arith.addf %156, %166 : vector<4x256xf32>
    %cst_116 = arith.constant 0.000000e+00 : f32
    %168 = vector.broadcast %cst_116 : f32 to vector<8x15xf32>
    %169 = vector.extract_strided_slice %103 {offsets = [0, 15], sizes = [8, 241], strides = [1, 1]} : vector<8x256xf32> to vector<8x241xf32>
    %170 = tpu.concatenate %169, %168 in 1 : vector<8x241xf32>, vector<8x15xf32> -> vector<8x256xf32>
    %c6_117 = arith.constant 6 : index
    %c0_118 = arith.constant 0 : index
    %c0_119 = arith.constant 0 : index
    %171 = vector.load %arg5[%c6_117, %c0_118, %c0_119] : memref<9x1x256xf32, #tpu.memory_space<vmem>>, vector<1x1x256xf32>
    %172 = vector.shape_cast %171 : vector<1x1x256xf32> to vector<1x256xf32>
    %173 = vector.broadcast %172 : vector<1x256xf32> to vector<8x256xf32>
    %174 = arith.mulf %170, %173 : vector<8x256xf32>
    %c6_120 = arith.constant 6 : index
    %c0_121 = arith.constant 0 : index
    %c0_122 = arith.constant 0 : index
    %175 = vector.load %arg4[%c6_120, %c0_121, %c0_122] : memref<9x4x8xf32, #tpu.memory_space<vmem>>, vector<1x4x8xf32>
    %176 = vector.shape_cast %175 : vector<1x4x8xf32> to vector<4x8xf32>
    %cst_123 = arith.constant dense<0.000000e+00> : vector<4x256xf32>
    %177 = tpu.matmul %176, %174, %cst_123 {dimension_numbers = #tpu.dot_dimension_numbers<[1], [0], [0], [1], [0, 0, 1, 1], [], []>} : vector<4x8xf32>, vector<8x256xf32>, vector<4x256xf32> -> vector<4x256xf32>
    %178 = arith.addf %167, %177 : vector<4x256xf32>
    %cst_124 = arith.constant 0.000000e+00 : f32
    %179 = vector.broadcast %cst_124 : f32 to vector<8x16xf32>
    %180 = vector.extract_strided_slice %103 {offsets = [0, 16], sizes = [8, 240], strides = [1, 1]} : vector<8x256xf32> to vector<8x240xf32>
    %181 = tpu.concatenate %180, %179 in 1 : vector<8x240xf32>, vector<8x16xf32> -> vector<8x256xf32>
    %c7_125 = arith.constant 7 : index
    %c0_126 = arith.constant 0 : index
    %c0_127 = arith.constant 0 : index
    %182 = vector.load %arg5[%c7_125, %c0_126, %c0_127] : memref<9x1x256xf32, #tpu.memory_space<vmem>>, vector<1x1x256xf32>
    %183 = vector.shape_cast %182 : vector<1x1x256xf32> to vector<1x256xf32>
    %184 = vector.broadcast %183 : vector<1x256xf32> to vector<8x256xf32>
    %185 = arith.mulf %181, %184 : vector<8x256xf32>
    %c7_128 = arith.constant 7 : index
    %c0_129 = arith.constant 0 : index
    %c0_130 = arith.constant 0 : index
    %186 = vector.load %arg4[%c7_128, %c0_129, %c0_130] : memref<9x4x8xf32, #tpu.memory_space<vmem>>, vector<1x4x8xf32>
    %187 = vector.shape_cast %186 : vector<1x4x8xf32> to vector<4x8xf32>
    %cst_131 = arith.constant dense<0.000000e+00> : vector<4x256xf32>
    %188 = tpu.matmul %187, %185, %cst_131 {dimension_numbers = #tpu.dot_dimension_numbers<[1], [0], [0], [1], [0, 0, 1, 1], [], []>} : vector<4x8xf32>, vector<8x256xf32>, vector<4x256xf32> -> vector<4x256xf32>
    %189 = arith.addf %178, %188 : vector<4x256xf32>
    %cst_132 = arith.constant 0.000000e+00 : f32
    %190 = vector.broadcast %cst_132 : f32 to vector<8x17xf32>
    %191 = vector.extract_strided_slice %103 {offsets = [0, 17], sizes = [8, 239], strides = [1, 1]} : vector<8x256xf32> to vector<8x239xf32>
    %192 = tpu.concatenate %191, %190 in 1 : vector<8x239xf32>, vector<8x17xf32> -> vector<8x256xf32>
    %c8_133 = arith.constant 8 : index
    %c0_134 = arith.constant 0 : index
    %c0_135 = arith.constant 0 : index
    %193 = vector.load %arg5[%c8_133, %c0_134, %c0_135] : memref<9x1x256xf32, #tpu.memory_space<vmem>>, vector<1x1x256xf32>
    %194 = vector.shape_cast %193 : vector<1x1x256xf32> to vector<1x256xf32>
    %195 = vector.broadcast %194 : vector<1x256xf32> to vector<8x256xf32>
    %196 = arith.mulf %192, %195 : vector<8x256xf32>
    %c8_136 = arith.constant 8 : index
    %c0_137 = arith.constant 0 : index
    %c0_138 = arith.constant 0 : index
    %197 = vector.load %arg4[%c8_136, %c0_137, %c0_138] : memref<9x4x8xf32, #tpu.memory_space<vmem>>, vector<1x4x8xf32>
    %198 = vector.shape_cast %197 : vector<1x4x8xf32> to vector<4x8xf32>
    %cst_139 = arith.constant dense<0.000000e+00> : vector<4x256xf32>
    %199 = tpu.matmul %198, %196, %cst_139 {dimension_numbers = #tpu.dot_dimension_numbers<[1], [0], [0], [1], [0, 0, 1, 1], [], []>} : vector<4x8xf32>, vector<8x256xf32>, vector<4x256xf32> -> vector<4x256xf32>
    %200 = arith.addf %189, %199 : vector<4x256xf32>
    %cst_140 = arith.constant 2.000000e+00 : f32
    %201 = vector.broadcast %cst_140 : f32 to vector<4x256xf32>
    %202 = arith.mulf %201, %200 : vector<4x256xf32>
    %203 = arith.subf %1, %202 : vector<4x256xf32>
    %c0_141 = arith.constant 0 : index
    %c0_142 = arith.constant 0 : index
    %c0_143 = arith.constant 0 : index
    %204 = vector.load %arg6[%c0_141, %c0_142, %c0_143] : memref<1x4x256xf32, #tpu.memory_space<vmem>>, vector<1x4x256xf32>
    %205 = vector.shape_cast %204 : vector<1x4x256xf32> to vector<4x256xf32>
    %206 = vector.shape_cast %203 : vector<4x256xf32> to vector<1x4x256xf32>
    tpu.vector_store %arg6[%c0_141, %c0_142, %c0_143], %206 {strides = array<i32>} : memref<1x4x256xf32, #tpu.memory_space<vmem>>, vector<1x4x256xf32>,
    return
  }
  func.func @transform_0(%arg0: i32) -> (i32, i32, i32) {
    %c0_i32 = arith.constant 0 : i32
    %c0_i32_0 = arith.constant 0 : i32
    %c0_i32_1 = arith.constant 0 : i32
    return %arg0, %c0_i32, %c0_i32_0 : i32, i32, i32
  }
  func.func @transform_1(%arg0: i32) -> (i32, i32, i32) {
    %c0_i32 = arith.constant 0 : i32
    %c0_i32_0 = arith.constant 0 : i32
    %c0_i32_1 = arith.constant 0 : i32
    %c0_i32_2 = arith.constant 0 : i32
    return %c0_i32, %c0_i32_0, %c0_i32_1 : i32, i32, i32
  }
  func.func @transform_2(%arg0: i32) -> (i32, i32) {
    %c0_i32 = arith.constant 0 : i32
    %c0_i32_0 = arith.constant 0 : i32
    %c0_i32_1 = arith.constant 0 : i32
    return %c0_i32, %c0_i32_0 : i32, i32
  }
  func.func @transform_3(%arg0: i32) -> (i32, i32, i32) {
    %c0_i32 = arith.constant 0 : i32
    %c0_i32_0 = arith.constant 0 : i32
    %c0_i32_1 = arith.constant 0 : i32
    %c0_i32_2 = arith.constant 0 : i32
    return %c0_i32, %c0_i32_0, %c0_i32_1 : i32, i32, i32
  }
  func.func @transform_4(%arg0: i32) -> (i32, i32, i32) {
    %c0_i32 = arith.constant 0 : i32
    %c0_i32_0 = arith.constant 0 : i32
    %c0_i32_1 = arith.constant 0 : i32
    %c0_i32_2 = arith.constant 0 : i32
    return %c0_i32, %c0_i32_0, %c0_i32_1 : i32, i32, i32
  }
  func.func @transform_5(%arg0: i32) -> (i32, i32, i32) {
    %c0_i32 = arith.constant 0 : i32
    %c0_i32_0 = arith.constant 0 : i32
    %c0_i32_1 = arith.constant 0 : i32
    return %arg0, %c0_i32, %c0_i32_0 : i32, i32, i32
  }
}

</mosaic_0001>

<llo_original>
// kernel: tpu_custom_call.1
$region0: #{tpu_custom_call.1}
  #allocation0 [shape = 'u32[]', space=smem, size = 0x4, offset = 0x4, fixed_abs, tag = 'smem constant byte address 0x4 - core index']
  #allocation1 [shape = 'u32[144,128]{1,0:T(1,128)}', space=vmem, size = 0x12000, scoped, tag = 'internal scratch']
  %s0 = inlined_call_operand.vmem [shape: f32[2,4,256], index: 0, kind: input, shape index: {}]
  %s1 = inlined_call_operand.vmem [shape: f32[9,8,4], index: 1, kind: input, shape index: {}]
  %s2 = inlined_call_operand.vmem [shape: f32[8,1], index: 2, kind: input, shape index: {}]
  %s3 = inlined_call_operand.vmem [shape: f32[9,4,8], index: 3, kind: input, shape index: {}]
  %s4 = inlined_call_operand.vmem [shape: f32[9,1,256], index: 4, kind: input, shape index: {}]
  %s5 = inlined_call_operand.hbm [shape: f32[2,4,256], index: 5, kind: output, shape index: {}]
  %s6 = sld [smem:[#allocation0]]
  $region53: #{tpu_custom_call.1} parent=0
    _
  %s8 = ssub.s32 1, %s6
  %s9 = scalar_select 0, %s8, %s6
  $region1: #{tpu_custom_call.1} parent=0
    #allocation2 [shape = 'u8[8192]{0}', space=vmem, size = 0x2000, scoped, tag = 'output window, operand 0']
    #allocation3 [shape = 's32[2]{0}', space=sflag, size = 0x8, scoped, tag = 'scoped memory for tpu_custom_call.1']
    %10 = vsyncpa [#allocation3], 0
    %s11 = scalar_lea.sflag [#allocation3], 1
    %12 = vsyncpa %s11, 0
    loop: start=0, step=1, limit=4
    $region2: #{tpu_custom_call.1} parent=1 // loop_pre_header
      _
    $region3: #{tpu_custom_call.1} parent=1 // loop_header
      %s14 = sphi 0, %s18
      %p15 = scmp.ge.s32.totalorder %s14, 4
      %s24 = sphi 0, %s26
      %s27 = sphi 0, %s24
      %s28 = sphi 0, %s27
      %s44 = sphi 0, %s28
      %s48 = sphi 0, %s48
      %s50 = sphi 0, %s48
      %s51 = sphi 0, %s50
      %s65 = sphi 0, %s51
      %s69 = sphi 0, %s69
      %s71 = sphi 0, %s69
      %s72 = sphi 0, %s71
      %s86 = sphi 0, %s72
      %s90 = sphi 0, %s90
      %s92 = sphi 0, %s90
      %s93 = sphi 0, %s92
      %s107 = sphi 0, %s93
      %s111 = sphi 0, %s111
      %s113 = sphi 0, %s111
      %s114 = sphi 0, %s113
      %s128 = sphi 0, %s114
      %s134 = sphi 0, %s136
      %s137 = sphi 0, %s134
      %s138 = sphi 0, %s137
      %s154 = sphi 0, %s138
    $region4: #{tpu_custom_call.1} parent=1 // loop_header_branch
      %17 = sbr.rel (%p15) target = $region8
    $region5: #{tpu_custom_call.1} parent=1 // loop_body
      %s19 = ssub.s32 %s14, 1
      %s20 = ssub.s32 %s14, 2
      %s21 = sadd.s32 %s14, 1
      %s22 = ssub.s32 %s14, %s21
      %p23 = scmp.eq.s32.totalorder %s22, 0
      %s25 = sadd.s32 %s24, 1
      %s26 = scalar_select %p23, %s24, %s25
      %p29 = pneg %p23
      %p30 = scmp.eq.s32.totalorder %s14, 1
      %p31 = por %p29, %p30
      %p32 = scmp.ne.s32.totalorder %s24, %s27
      %p33 = scmp.eq.s32.totalorder %s14, 0
      %p34 = por %p32, %p33
      %p35 = scmp.ne.s32.totalorder %s24, %s27
      %p36 = scmp.eq.s32.totalorder %s19, 1
      %p37 = por %p35, %p36
      %p38 = scmp.ne.s32.totalorder %s27, %s28
      %p39 = scmp.eq.s32.totalorder %s19, 0
      %p40 = por %p38, %p39
      %p41 = scmp.ne.s32.totalorder %s27, %s28
      %p42 = scmp.eq.s32.totalorder %s20, 1
      %p43 = por %p41, %p42
      %p45 = scmp.ne.s32.totalorder %s28, %s44
      %p46 = scmp.eq.s32.totalorder %s20, 0
      %p47 = por %p45, %p46
      %s49 = sadd.s32 %s48, 1
      %p52 = scmp.eq.s32.totalorder %s14, 1
      %p53 = scmp.ne.s32.totalorder %s48, %s50
      %p54 = scmp.eq.s32.totalorder %s14, 0
      %p55 = por %p53, %p54
      %p56 = scmp.ne.s32.totalorder %s48, %s50
      %p57 = scmp.eq.s32.totalorder %s19, 1
      %p58 = por %p56, %p57
      %p59 = scmp.ne.s32.totalorder %s50, %s51
      %p60 = scmp.eq.s32.totalorder %s19, 0
      %p61 = por %p59, %p60
      %p62 = scmp.ne.s32.totalorder %s50, %s51
      %p63 = scmp.eq.s32.totalorder %s20, 1
      %p64 = por %p62, %p63
      %p66 = scmp.ne.s32.totalorder %s51, %s65
      %p67 = scmp.eq.s32.totalorder %s20, 0
      %p68 = por %p66, %p67
      %s70 = sadd.s32 %s69, 1
      %p73 = scmp.eq.s32.totalorder %s14, 1
      %p74 = scmp.ne.s32.totalorder %s69, %s71
      %p75 = scmp.eq.s32.totalorder %s14, 0
      %p76 = por %p74, %p75
      %p77 = scmp.ne.s32.totalorder %s69, %s71
      %p78 = scmp.eq.s32.totalorder %s19, 1
      %p79 = por %p77, %p78
      %p80 = scmp.ne.s32.totalorder %s71, %s72
      %p81 = scmp.eq.s32.totalorder %s19, 0
      %p82 = por %p80, %p81
      %p83 = scmp.ne.s32.totalorder %s71, %s72
      %p84 = scmp.eq.s32.totalorder %s20, 1
      %p85 = por %p83, %p84
      %p87 = scmp.ne.s32.totalorder %s72, %s86
      %p88 = scmp.eq.s32.totalorder %s20, 0
      %p89 = por %p87, %p88
      %s91 = sadd.s32 %s90, 1
      %p94 = scmp.eq.s32.totalorder %s14, 1
      %p95 = scmp.ne.s32.totalorder %s90, %s92
      %p96 = scmp.eq.s32.totalorder %s14, 0
      %p97 = por %p95, %p96
      %p98 = scmp.ne.s32.totalorder %s90, %s92
      %p99 = scmp.eq.s32.totalorder %s19, 1
      %p100 = por %p98, %p99
      %p101 = scmp.ne.s32.totalorder %s92, %s93
      %p102 = scmp.eq.s32.totalorder %s19, 0
      %p103 = por %p101, %p102
      %p104 = scmp.ne.s32.totalorder %s92, %s93
      %p105 = scmp.eq.s32.totalorder %s20, 1
      %p106 = por %p104, %p105
      %p108 = scmp.ne.s32.totalorder %s93, %s107
      %p109 = scmp.eq.s32.totalorder %s20, 0
      %p110 = por %p108, %p109
      %s112 = sadd.s32 %s111, 1
      %p115 = scmp.eq.s32.totalorder %s14, 1
      %p116 = scmp.ne.s32.totalorder %s111, %s113
      %p117 = scmp.eq.s32.totalorder %s14, 0
      %p118 = por %p116, %p117
      %p119 = scmp.ne.s32.totalorder %s111, %s113
      %p120 = scmp.eq.s32.totalorder %s19, 1
      %p121 = por %p119, %p120
      %p122 = scmp.ne.s32.totalorder %s113, %s114
      %p123 = scmp.eq.s32.totalorder %s19, 0
      %p124 = por %p122, %p123
      %p125 = scmp.ne.s32.totalorder %s113, %s114
      %p126 = scmp.eq.s32.totalorder %s20, 1
      %p127 = por %p125, %p126
      %p129 = scmp.ne.s32.totalorder %s114, %s128
      %p130 = scmp.eq.s32.totalorder %s20, 0
      %p131 = por %p129, %p130
      %s132 = ssub.s32 %s14, %s21
      %p133 = scmp.eq.s32.totalorder %s132, 0
      %s135 = sadd.s32 %s134, 1
      %s136 = scalar_select %p133, %s134, %s135
      %p139 = pneg %p133
      %p140 = scmp.eq.s32.totalorder %s14, 1
      %p141 = por %p139, %p140
      %p142 = scmp.ne.s32.totalorder %s134, %s137
      %p143 = scmp.eq.s32.totalorder %s14, 0
      %p144 = por %p142, %p143
      %p145 = scmp.ne.s32.totalorder %s134, %s137
      %p146 = scmp.eq.s32.totalorder %s19, 1
      %p147 = por %p145, %p146
      %p148 = scmp.ne.s32.totalorder %s137, %s138
      %p149 = scmp.eq.s32.totalorder %s19, 0
      %p150 = por %p148, %p149
      %p151 = scmp.ne.s32.totalorder %s137, %s138
      %p152 = scmp.eq.s32.totalorder %s20, 1
      %p153 = por %p151, %p152
      %p155 = scmp.ne.s32.totalorder %s138, %s154
      %p156 = scmp.eq.s32.totalorder %s20, 0
      %p157 = por %p155, %p156
      %p158 = scmp.le.s32.totalorder 1, %s14
      %p159 = scmp.lt.s32.totalorder %s14, 3
      %p160 = pnand %p158, %p159
      %p161 = pneg %p160
      // Predicated region
      $region9: #{tpu_custom_call.1} parent=5 // pred_check
        _
      $region10: #{tpu_custom_call.1} parent=5 // pred_check_branch
        %163 = sbr.rel (%p160) target = $region12
      $region11: #{tpu_custom_call.1} parent=5 // pred_region
        %s164 = ssub.s32 %s14, 1
        // Predicated region
        $region13: #{tpu_custom_call.1} parent=11 // pred_check
          %p165 = pneg %p61
        $region14: #{tpu_custom_call.1} parent=11 // pred_check_branch
          %167 = sbr.rel (%p165) target = $region16
        $region15: #{tpu_custom_call.1} parent=11 // pred_region
          _
        $region16: #{tpu_custom_call.1} parent=11 // pred_fallthru
          _
        // Predicated region
        $region17: #{tpu_custom_call.1} parent=11 // pred_check
          %p168 = pneg %p82
        $region18: #{tpu_custom_call.1} parent=11 // pred_check_branch
          %170 = sbr.rel (%p168) target = $region20
        $region19: #{tpu_custom_call.1} parent=11 // pred_region
          _
        $region20: #{tpu_custom_call.1} parent=11 // pred_fallthru
          _
        // Predicated region
        $region21: #{tpu_custom_call.1} parent=11 // pred_check
          %p171 = pneg %p103
        $region22: #{tpu_custom_call.1} parent=11 // pred_check_branch
          %173 = sbr.rel (%p171) target = $region24
        $region23: #{tpu_custom_call.1} parent=11 // pred_region
          _
        $region24: #{tpu_custom_call.1} parent=11 // pred_fallthru
          _
        // Predicated region
        $region25: #{tpu_custom_call.1} parent=11 // pred_check
          %p174 = pneg %p124
        $region26: #{tpu_custom_call.1} parent=11 // pred_check_branch
          %176 = sbr.rel (%p174) target = $region28
        $region27: #{tpu_custom_call.1} parent=11 // pred_region
          _
        $region28: #{tpu_custom_call.1} parent=11 // pred_fallthru
          _
      $region12: #{tpu_custom_call.1} parent=5 // pred_fallthru
        _
      %p177 = scmp.lt.s32.totalorder %s14, 2
      // Predicated region
      $region29: #{tpu_custom_call.1} parent=5 // pred_check
        %p178 = pneg %p177
      $region30: #{tpu_custom_call.1} parent=5 // pred_check_branch
        %180 = sbr.rel (%p178) target = $region32
      $region31: #{tpu_custom_call.1} parent=5 // pred_region
        // Predicated region
        $region33: #{tpu_custom_call.1} parent=31 // pred_check
          %p181 = pneg %p34
        $region34: #{tpu_custom_call.1} parent=31 // pred_check_branch
          %183 = sbr.rel (%p181) target = $region36
        $region35: #{tpu_custom_call.1} parent=31 // pred_region
          %p184 = scmp.lt.s32.totalorder %s14, 1
          %s185 = scalar_select %p184, %s14, 1
          %s186 = smul.addr %s185, 2
          %s187 = smul.addr %s186, 4
          %s188 = scalar_lea.vmem %s0, %s187
        $region36: #{tpu_custom_call.1} parent=31 // pred_fallthru
          _
      $region32: #{tpu_custom_call.1} parent=5 // pred_fallthru
        _
      %p189 = scmp.le.s32.totalorder 1, %s14
      %p190 = scmp.lt.s32.totalorder %s14, 3
      %p191 = pnand %p189, %p190
      %p192 = pneg %p191
      // Predicated region
      $region37: #{tpu_custom_call.1} parent=5 // pred_check
        _
      $region38: #{tpu_custom_call.1} parent=5 // pred_check_branch
        %194 = sbr.rel (%p191) target = $region40
      $region39: #{tpu_custom_call.1} parent=5 // pred_region
        %s195 = ssub.s32 %s14, 1
        %p196 = scmp.lt.s32.totalorder %s19, 1
        %s197 = scalar_select %p196, %s19, 1
        %s198 = smul.addr %s197, 2
        %s199 = smul.addr %s198, 4
        %s200 = scalar_lea.vmem %s0, %s199
        %p201 = pneg %p40
        %p202 = pneg %p37
        %p203 = pneg %p61
        %p204 = pneg %p58
        %p205 = pneg %p82
        %p206 = pneg %p79
        %p207 = pneg %p103
        %p208 = pneg %p100
        %p209 = pneg %p124
        %p210 = pneg %p121
        %p211 = pneg %p150
        %p212 = pneg %p147
        %s213 = sand.u32 %s137, 1
        %s214 = scalar_lea.sflag [#allocation3], %s213
        %s215 = sand.u32 %s137, 1
        %s216 = smul.addr %s215, 8
        %s217 = scalar_lea.vmem [#allocation2], %s216
        %p218 = scmp.lt.s32.totalorder %s19, 1
        %s219 = scalar_select %p218, %s19, 1
        %s220 = smul.addr %s219, 2
        %s221 = smul.addr %s220, 4
        %s222 = scalar_lea.vmem %s0, %s221
        %v223 = vld [vmem:[%s222] sm:$0xff]
        %v225 = vcombine.high %v223, %v223
        %226 = vrot.lane.b32.xlu0 %v223, 17
        %v227 = vpop.permute.xlu0 %226
        %228 = vrot.lane.b32.xlu0 %v225, 17
        %v229 = vpop.permute.xlu0 %228
        %vm230 = vcmask 138240
        %v231 = vsel %vm230, %v227, %v229
        %v234 = vsel %vm230, 0.0, %v227
        %v235 = vld [vmem:[%s4] sm:$0x3]
        %v237 = vlaneseq
        %v238 = vshrl.u32 %v237, 7
        %v239 = vsub.s32 0, %v238
        %v240 = vrot.slane %v235, %v239
        %v241 = vlaneseq
        %v242 = vshrl.u32 %v241, 7
        %v243 = vsub.s32 1, %v242
        %v244 = vrot.slane %v235, %v243
        %v247 = vmul.f32 %v234, %v240
        %v248 = vmul.f32 %v231, %v244
        %v249 = vld [vmem:[%s1] sm:$0xff]
        %250 = vrot.lane.b32.xlu0 %v223, 16
        %v251 = vpop.permute.xlu0 %250
        %252 = vrot.lane.b32.xlu0 %v225, 16
        %v253 = vpop.permute.xlu0 %252
        %vm254 = vcmask 130048
        %v255 = vsel %vm254, %v251, %v253
        %v258 = vsel %vm254, 0.0, %v251
        %s259 = scalar_lea.vmem %s4, 2
        %v260 = vld [vmem:[%s259] sm:$0x3]
        %v262 = vlaneseq
        %v263 = vshrl.u32 %v262, 7
        %v264 = vsub.s32 0, %v263
        %v265 = vrot.slane %v260, %v264
        %v266 = vlaneseq
        %v267 = vshrl.u32 %v266, 7
        %v268 = vsub.s32 1, %v267
        %v269 = vrot.slane %v260, %v268
        %v272 = vmul.f32 %v258, %v265
        %v273 = vmul.f32 %v255, %v269
        %s274 = scalar_lea.vmem %s1, 8
        %v275 = vld [vmem:[%s274] sm:$0xff]
        %vm276 = vcmask 31744
        %v278 = vsel %vm276, %v275, 0
        %vm280 = vcmask 1043456
        %v282 = vsel %vm280, %v272, 0
        %v285 = vsel %vm280, %v273, 0
        %287 = vmatprep.subr.mxu0 %v285
        %288 = vmatpush1.msra.mxu0 %v282
        %289 = vmatprep.subr.mxu0 0.0
        %290 = vmatpush1.msra.mxu0 0.0
        %291 = vmatprep.subr.mxu0 0.0
        %292 = vmatpush1.msra.mxu0 0.0
        %293 = vmatprep.subr.mxu0 0.0
        %294 = vmatpush1.msra.mxu0 0.0
        %295 = vmatprep.subr.mxu0 0.0
        %296 = vmatpush1.msra.mxu0 0.0
        %297 = vmatprep.subr.mxu0 0.0
        %298 = vmatpush1.msra.mxu0 0.0
        %299 = vmatprep.subr.mxu0 0.0
        %300 = vmatpush1.msra.mxu0 0.0
        %301 = vmatprep.subr.mxu0 0.0
        %302 = vmatpush1.msra.mxu0 0.0
        %303 = vmatprep.subr.mxu0 0.0
        %304 = vmatpush1.msra.mxu0 0.0
        %305 = vmatprep.subr.mxu0 0.0
        %306 = vmatpush1.msra.mxu0 0.0
        %307 = vmatprep.subr.mxu0 0.0
        %308 = vmatpush1.msra.mxu0 0.0
        %309 = vmatprep.subr.mxu0 0.0
        %310 = vmatpush1.msra.mxu0 0.0
        %311 = vmatprep.subr.mxu0 0.0
        %312 = vmatpush1.msra.mxu0 0.0
        %313 = vmatprep.subr.mxu0 0.0
        %314 = vmatpush1.msra.mxu0 0.0
        %315 = vmatprep.subr.mxu0 0.0
        %316 = vmatpush1.msra.mxu0 0.0
        %317 = vmatprep.subr.mxu0 0.0
        %318 = vmatpush1.msra.mxu0 0.0
        %319 = vmatprep.subr.mxu0 0.0
        %320 = vmatpush1.msra.mxu0 0.0
        %321 = vmatprep.subr.mxu0 0.0
        %322 = vmatpush1.msra.mxu0 0.0
        %323 = vmatprep.subr.mxu0 0.0
        %324 = vmatpush1.msra.mxu0 0.0
        %325 = vmatprep.subr.mxu0 0.0
        %326 = vmatpush1.msra.mxu0 0.0
        %327 = vmatprep.subr.mxu0 0.0
        %328 = vmatpush1.msra.mxu0 0.0
        %329 = vmatprep.subr.mxu0 0.0
        %330 = vmatpush1.msra.mxu0 0.0
        %331 = vmatprep.subr.mxu0 0.0
        %332 = vmatpush1.msra.mxu0 0.0
        %333 = vmatprep.subr.mxu0 0.0
        %334 = vmatpush1.msra.mxu0 0.0
        %335 = vmatprep.subr.mxu0 0.0
        %336 = vmatpush1.msra.mxu0 0.0
        %337 = vmatprep.subr.mxu0 0.0
        %338 = vmatpush1.msra.mxu0 0.0
        %339 = vmatprep.subr.mxu0 0.0
        %340 = vmatpush1.msra.mxu0 0.0
        %341 = vmatprep.subr.mxu0 0.0
        %342 = vmatpush1.msra.mxu0 0.0
        %343 = vmatprep.subr.mxu0 0.0
        %344 = vmatpush1.msra.mxu0 0.0
        %345 = vmatprep.subr.mxu0 0.0
        %346 = vmatpush1.msra.mxu0 0.0
        %347 = vmatprep.subr.mxu0 0.0
        %348 = vmatpush1.msra.mxu0 0.0
        %349 = vmatprep.subr.mxu0 0.0
        %350 = vmatpush1.msra.mxu0 0.0
        %351 = vmatprep.mubr.f32.mxu0 0.0
        %352 = vmatmul.mubr.f32.gmra.mrb[0].mxu0 %v278
        %v353 = vpop.f32.mrb[0].mxu0
        %v354 = vadd.f32 0.0, %v353
        %v355 = vpop.f32.mrb[0].mxu0
        %v356 = vadd.f32 0.0, %v355
        %357 = vdwg.mxu0
        %v359 = vsel %vm276, %v249, 0
        %v362 = vsel %vm280, %v247, 0
        %v365 = vsel %vm280, %v248, 0
        %367 = vmatprep.subr.mxu0 %v365
        %368 = vmatpush1.msra.mxu0 %v362
        %369 = vmatprep.subr.mxu0 0.0
        %370 = vmatpush1.msra.mxu0 0.0
        %371 = vmatprep.subr.mxu0 0.0
        %372 = vmatpush1.msra.mxu0 0.0
        %373 = vmatprep.subr.mxu0 0.0
        %374 = vmatpush1.msra.mxu0 0.0
        %375 = vmatprep.subr.mxu0 0.0
        %376 = vmatpush1.msra.mxu0 0.0
        %377 = vmatprep.subr.mxu0 0.0
        %378 = vmatpush1.msra.mxu0 0.0
        %379 = vmatprep.subr.mxu0 0.0
        %380 = vmatpush1.msra.mxu0 0.0
        %381 = vmatprep.subr.mxu0 0.0
        %382 = vmatpush1.msra.mxu0 0.0
        %383 = vmatprep.subr.mxu0 0.0
        %384 = vmatpush1.msra.mxu0 0.0
        %385 = vmatprep.subr.mxu0 0.0
        %386 = vmatpush1.msra.mxu0 0.0
        %387 = vmatprep.subr.mxu0 0.0
        %388 = vmatpush1.msra.mxu0 0.0
        %389 = vmatprep.subr.mxu0 0.0
        %390 = vmatpush1.msra.mxu0 0.0
        %391 = vmatprep.subr.mxu0 0.0
        %392 = vmatpush1.msra.mxu0 0.0
        %393 = vmatprep.subr.mxu0 0.0
        %394 = vmatpush1.msra.mxu0 0.0
        %395 = vmatprep.subr.mxu0 0.0
        %396 = vmatpush1.msra.mxu0 0.0
        %397 = vmatprep.subr.mxu0 0.0
        %398 = vmatpush1.msra.mxu0 0.0
        %399 = vmatprep.subr.mxu0 0.0
        %400 = vmatpush1.msra.mxu0 0.0
        %401 = vmatprep.subr.mxu0 0.0
        %402 = vmatpush1.msra.mxu0 0.0
        %403 = vmatprep.subr.mxu0 0.0
        %404 = vmatpush1.msra.mxu0 0.0
        %405 = vmatprep.subr.mxu0 0.0
        %406 = vmatpush1.msra.mxu0 0.0
        %407 = vmatprep.subr.mxu0 0.0
        %408 = vmatpush1.msra.mxu0 0.0
        %409 = vmatprep.subr.mxu0 0.0
        %410 = vmatpush1.msra.mxu0 0.0
        %411 = vmatprep.subr.mxu0 0.0
        %412 = vmatpush1.msra.mxu0 0.0
        %413 = vmatprep.subr.mxu0 0.0
        %414 = vmatpush1.msra.mxu0 0.0
        %415 = vmatprep.subr.mxu0 0.0
        %416 = vmatpush1.msra.mxu0 0.0
        %417 = vmatprep.subr.mxu0 0.0
        %418 = vmatpush1.msra.mxu0 0.0
        %419 = vmatprep.subr.mxu0 0.0
        %420 = vmatpush1.msra.mxu0 0.0
        %421 = vmatprep.subr.mxu0 0.0
        %422 = vmatpush1.msra.mxu0 0.0
        %423 = vmatprep.subr.mxu0 0.0
        %424 = vmatpush1.msra.mxu0 0.0
        %425 = vmatprep.subr.mxu0 0.0
        %426 = vmatpush1.msra.mxu0 0.0
        %427 = vmatprep.subr.mxu0 0.0
        %428 = vmatpush1.msra.mxu0 0.0
        %429 = vmatprep.subr.mxu0 0.0
        %430 = vmatpush1.msra.mxu0 0.0
        %431 = vmatprep.mubr.f32.mxu0 0.0
        %432 = vmatmul.mubr.f32.gmra.mrb[0].mxu0 %v359
        %v433 = vpop.f32.mrb[0].mxu0
        %v434 = vadd.f32 %v354, %v433
        %v435 = vpop.f32.mrb[0].mxu0
        %v436 = vadd.f32 %v356, %v435
        %437 = vdwg.mxu0
        %438 = vrot.lane.b32.xlu0 %v223, 15
        %v439 = vpop.permute.xlu0 %438
        %440 = vrot.lane.b32.xlu0 %v225, 15
        %v441 = vpop.permute.xlu0 %440
        %vm442 = vcmask 121856
        %v443 = vsel %vm442, %v439, %v441
        %v446 = vsel %vm442, 0.0, %v439
        %s447 = scalar_lea.vmem %s4, 4
        %v448 = vld [vmem:[%s447] sm:$0x3]
        %v450 = vlaneseq
        %v451 = vshrl.u32 %v450, 7
        %v452 = vsub.s32 0, %v451
        %v453 = vrot.slane %v448, %v452
        %v454 = vlaneseq
        %v455 = vshrl.u32 %v454, 7
        %v456 = vsub.s32 1, %v455
        %v457 = vrot.slane %v448, %v456
        %v460 = vmul.f32 %v446, %v453
        %v461 = vmul.f32 %v443, %v457
        %s462 = scalar_lea.vmem %s1, 16
        %v463 = vld [vmem:[%s462] sm:$0xff]
        %v465 = vsel %vm276, %v463, 0
        %v468 = vsel %vm280, %v460, 0
        %v471 = vsel %vm280, %v461, 0
        %473 = vmatprep.subr.mxu0 %v471
        %474 = vmatpush1.msra.mxu0 %v468
        %475 = vmatprep.subr.mxu0 0.0
        %476 = vmatpush1.msra.mxu0 0.0
        %477 = vmatprep.subr.mxu0 0.0
        %478 = vmatpush1.msra.mxu0 0.0
        %479 = vmatprep.subr.mxu0 0.0
        %480 = vmatpush1.msra.mxu0 0.0
        %481 = vmatprep.subr.mxu0 0.0
        %482 = vmatpush1.msra.mxu0 0.0
        %483 = vmatprep.subr.mxu0 0.0
        %484 = vmatpush1.msra.mxu0 0.0
        %485 = vmatprep.subr.mxu0 0.0
        %486 = vmatpush1.msra.mxu0 0.0
        %487 = vmatprep.subr.mxu0 0.0
        %488 = vmatpush1.msra.mxu0 0.0
        %489 = vmatprep.subr.mxu0 0.0
        %490 = vmatpush1.msra.mxu0 0.0
        %491 = vmatprep.subr.mxu0 0.0
        %492 = vmatpush1.msra.mxu0 0.0
        %493 = vmatprep.subr.mxu0 0.0
        %494 = vmatpush1.msra.mxu0 0.0
        %495 = vmatprep.subr.mxu0 0.0
        %496 = vmatpush1.msra.mxu0 0.0
        %497 = vmatprep.subr.mxu0 0.0
        %498 = vmatpush1.msra.mxu0 0.0
        %499 = vmatprep.subr.mxu0 0.0
        %500 = vmatpush1.msra.mxu0 0.0
        %501 = vmatprep.subr.mxu0 0.0
        %502 = vmatpush1.msra.mxu0 0.0
        %503 = vmatprep.subr.mxu0 0.0
        %504 = vmatpush1.msra.mxu0 0.0
        %505 = vmatprep.subr.mxu0 0.0
        %506 = vmatpush1.msra.mxu0 0.0
        %507 = vmatprep.subr.mxu0 0.0
        %508 = vmatpush1.msra.mxu0 0.0
        %509 = vmatprep.subr.mxu0 0.0
        %510 = vmatpush1.msra.mxu0 0.0
        %511 = vmatprep.subr.mxu0 0.0
        %512 = vmatpush1.msra.mxu0 0.0
        %513 = vmatprep.subr.mxu0 0.0
        %514 = vmatpush1.msra.mxu0 0.0
        %515 = vmatprep.subr.mxu0 0.0
        %516 = vmatpush1.msra.mxu0 0.0
        %517 = vmatprep.subr.mxu0 0.0
        %518 = vmatpush1.msra.mxu0 0.0
        %519 = vmatprep.subr.mxu0 0.0
        %520 = vmatpush1.msra.mxu0 0.0
        %521 = vmatprep.subr.mxu0 0.0
        %522 = vmatpush1.msra.mxu0 0.0
        %523 = vmatprep.subr.mxu0 0.0
        %524 = vmatpush1.msra.mxu0 0.0
        %525 = vmatprep.subr.mxu0 0.0
        %526 = vmatpush1.msra.mxu0 0.0
        %527 = vmatprep.subr.mxu0 0.0
        %528 = vmatpush1.msra.mxu0 0.0
        %529 = vmatprep.subr.mxu0 0.0
        %530 = vmatpush1.msra.mxu0 0.0
        %531 = vmatprep.subr.mxu0 0.0
        %532 = vmatpush1.msra.mxu0 0.0
        %533 = vmatprep.subr.mxu0 0.0
        %534 = vmatpush1.msra.mxu0 0.0
        %535 = vmatprep.subr.mxu0 0.0
        %536 = vmatpush1.msra.mxu0 0.0
        %537 = vmatprep.mubr.f32.mxu0 0.0
        %538 = vmatmul.mubr.f32.gmra.mrb[0].mxu0 %v465
        %v539 = vpop.f32.mrb[0].mxu0
        %v540 = vadd.f32 0.0, %v539
        %v541 = vpop.f32.mrb[0].mxu0
        %v542 = vadd.f32 0.0, %v541
        %543 = vdwg.mxu0
        %v544 = vadd.f32 %v434, %v540
        %v545 = vadd.f32 %v436, %v542
        %546 = vrot.lane.b32.xlu0 %v223, 1
        %v547 = vpop.permute.xlu0 %546
        %548 = vrot.lane.b32.xlu0 %v225, 1
        %v549 = vpop.permute.xlu0 %548
        %vm550 = vcmask 7168
        %v551 = vsel %vm550, %v547, %v549
        %v554 = vsel %vm550, 0.0, %v547
        %s555 = scalar_lea.vmem %s4, 6
        %v556 = vld [vmem:[%s555] sm:$0x3]
        %v558 = vlaneseq
        %v559 = vshrl.u32 %v558, 7
        %v560 = vsub.s32 0, %v559
        %v561 = vrot.slane %v556, %v560
        %v562 = vlaneseq
        %v563 = vshrl.u32 %v562, 7
        %v564 = vsub.s32 1, %v563
        %v565 = vrot.slane %v556, %v564
        %v568 = vmul.f32 %v554, %v561
        %v569 = vmul.f32 %v551, %v565
        %s570 = scalar_lea.vmem %s1, 24
        %v571 = vld [vmem:[%s570] sm:$0xff]
        %v573 = vsel %vm276, %v571, 0
        %v576 = vsel %vm280, %v568, 0
        %v579 = vsel %vm280, %v569, 0
        %581 = vmatprep.subr.mxu0 %v579
        %582 = vmatpush1.msra.mxu0 %v576
        %583 = vmatprep.subr.mxu0 0.0
        %584 = vmatpush1.msra.mxu0 0.0
        %585 = vmatprep.subr.mxu0 0.0
        %586 = vmatpush1.msra.mxu0 0.0
        %587 = vmatprep.subr.mxu0 0.0
        %588 = vmatpush1.msra.mxu0 0.0
        %589 = vmatprep.subr.mxu0 0.0
        %590 = vmatpush1.msra.mxu0 0.0
        %591 = vmatprep.subr.mxu0 0.0
        %592 = vmatpush1.msra.mxu0 0.0
        %593 = vmatprep.subr.mxu0 0.0
        %594 = vmatpush1.msra.mxu0 0.0
        %595 = vmatprep.subr.mxu0 0.0
        %596 = vmatpush1.msra.mxu0 0.0
        %597 = vmatprep.subr.mxu0 0.0
        %598 = vmatpush1.msra.mxu0 0.0
        %599 = vmatprep.subr.mxu0 0.0
        %600 = vmatpush1.msra.mxu0 0.0
        %601 = vmatprep.subr.mxu0 0.0
        %602 = vmatpush1.msra.mxu0 0.0
        %603 = vmatprep.subr.mxu0 0.0
        %604 = vmatpush1.msra.mxu0 0.0
        %605 = vmatprep.subr.mxu0 0.0
        %606 = vmatpush1.msra.mxu0 0.0
        %607 = vmatprep.subr.mxu0 0.0
        %608 = vmatpush1.msra.mxu0 0.0
        %609 = vmatprep.subr.mxu0 0.0
        %610 = vmatpush1.msra.mxu0 0.0
        %611 = vmatprep.subr.mxu0 0.0
        %612 = vmatpush1.msra.mxu0 0.0
        %613 = vmatprep.subr.mxu0 0.0
        %614 = vmatpush1.msra.mxu0 0.0
        %615 = vmatprep.subr.mxu0 0.0
        %616 = vmatpush1.msra.mxu0 0.0
        %617 = vmatprep.subr.mxu0 0.0
        %618 = vmatpush1.msra.mxu0 0.0
        %619 = vmatprep.subr.mxu0 0.0
        %620 = vmatpush1.msra.mxu0 0.0
        %621 = vmatprep.subr.mxu0 0.0
        %622 = vmatpush1.msra.mxu0 0.0
        %623 = vmatprep.subr.mxu0 0.0
        %624 = vmatpush1.msra.mxu0 0.0
        %625 = vmatprep.subr.mxu0 0.0
        %626 = vmatpush1.msra.mxu0 0.0
        %627 = vmatprep.subr.mxu0 0.0
        %628 = vmatpush1.msra.mxu0 0.0
        %629 = vmatprep.subr.mxu0 0.0
        %630 = vmatpush1.msra.mxu0 0.0
        %631 = vmatprep.subr.mxu0 0.0
        %632 = vmatpush1.msra.mxu0 0.0
        %633 = vmatprep.subr.mxu0 0.0
        %634 = vmatpush1.msra.mxu0 0.0
        %635 = vmatprep.subr.mxu0 0.0
        %636 = vmatpush1.msra.mxu0 0.0
        %637 = vmatprep.subr.mxu0 0.0
        %638 = vmatpush1.msra.mxu0 0.0
        %639 = vmatprep.subr.mxu0 0.0
        %640 = vmatpush1.msra.mxu0 0.0
        %641 = vmatprep.subr.mxu0 0.0
        %642 = vmatpush1.msra.mxu0 0.0
        %643 = vmatprep.subr.mxu0 0.0
        %644 = vmatpush1.msra.mxu0 0.0
        %645 = vmatprep.mubr.f32.mxu0 0.0
        %646 = vmatmul.mubr.f32.gmra.mrb[0].mxu0 %v573
        %v647 = vpop.f32.mrb[0].mxu0
        %v648 = vadd.f32 0.0, %v647
        %v649 = vpop.f32.mrb[0].mxu0
        %v650 = vadd.f32 0.0, %v649
        %651 = vdwg.mxu0
        %v652 = vadd.f32 %v544, %v648
        %v653 = vadd.f32 %v545, %v650
        %s654 = scalar_lea.vmem %s4, 8
        %v655 = vld [vmem:[%s654] sm:$0x3]
        %v657 = vlaneseq
        %v658 = vshrl.u32 %v657, 7
        %v659 = vsub.s32 0, %v658
        %v660 = vrot.slane %v655, %v659
        %v661 = vlaneseq
        %v662 = vshrl.u32 %v661, 7
        %v663 = vsub.s32 1, %v662
        %v664 = vrot.slane %v655, %v663
        %v665 = vcombine.low %v660, %v664
        %v667 = vmul.f32 %v223, %v665
        %s668 = scalar_lea.vmem %s1, 32
        %v669 = vld [vmem:[%s668] sm:$0xff]
        %v671 = vcombine.high %v667, %v667
        %v673 = vsel %vm276, %v669, 0
        %v675 = vsel %vm280, %v667, 0
        %v677 = vsel %vm280, %v671, 0
        %679 = vmatprep.subr.mxu0 %v677
        %680 = vmatpush1.msra.mxu0 %v675
        %681 = vmatprep.subr.mxu0 0.0
        %682 = vmatpush1.msra.mxu0 0.0
        %683 = vmatprep.subr.mxu0 0.0
        %684 = vmatpush1.msra.mxu0 0.0
        %685 = vmatprep.subr.mxu0 0.0
        %686 = vmatpush1.msra.mxu0 0.0
        %687 = vmatprep.subr.mxu0 0.0
        %688 = vmatpush1.msra.mxu0 0.0
        %689 = vmatprep.subr.mxu0 0.0
        %690 = vmatpush1.msra.mxu0 0.0
        %691 = vmatprep.subr.mxu0 0.0
        %692 = vmatpush1.msra.mxu0 0.0
        %693 = vmatprep.subr.mxu0 0.0
        %694 = vmatpush1.msra.mxu0 0.0
        %695 = vmatprep.subr.mxu0 0.0
        %696 = vmatpush1.msra.mxu0 0.0
        %697 = vmatprep.subr.mxu0 0.0
        %698 = vmatpush1.msra.mxu0 0.0
        %699 = vmatprep.subr.mxu0 0.0
        %700 = vmatpush1.msra.mxu0 0.0
        %701 = vmatprep.subr.mxu0 0.0
        %702 = vmatpush1.msra.mxu0 0.0
        %703 = vmatprep.subr.mxu0 0.0
        %704 = vmatpush1.msra.mxu0 0.0
        %705 = vmatprep.subr.mxu0 0.0
        %706 = vmatpush1.msra.mxu0 0.0
        %707 = vmatprep.subr.mxu0 0.0
        %708 = vmatpush1.msra.mxu0 0.0
        %709 = vmatprep.subr.mxu0 0.0
        %710 = vmatpush1.msra.mxu0 0.0
        %711 = vmatprep.subr.mxu0 0.0
        %712 = vmatpush1.msra.mxu0 0.0
        %713 = vmatprep.subr.mxu0 0.0
        %714 = vmatpush1.msra.mxu0 0.0
        %715 = vmatprep.subr.mxu0 0.0
        %716 = vmatpush1.msra.mxu0 0.0
        %717 = vmatprep.subr.mxu0 0.0
        %718 = vmatpush1.msra.mxu0 0.0
        %719 = vmatprep.subr.mxu0 0.0
        %720 = vmatpush1.msra.mxu0 0.0
        %721 = vmatprep.subr.mxu0 0.0
        %722 = vmatpush1.msra.mxu0 0.0
        %723 = vmatprep.subr.mxu0 0.0
        %724 = vmatpush1.msra.mxu0 0.0
        %725 = vmatprep.subr.mxu0 0.0
        %726 = vmatpush1.msra.mxu0 0.0
        %727 = vmatprep.subr.mxu0 0.0
        %728 = vmatpush1.msra.mxu0 0.0
        %729 = vmatprep.subr.mxu0 0.0
        %730 = vmatpush1.msra.mxu0 0.0
        %731 = vmatprep.subr.mxu0 0.0
        %732 = vmatpush1.msra.mxu0 0.0
        %733 = vmatprep.subr.mxu0 0.0
        %734 = vmatpush1.msra.mxu0 0.0
        %735 = vmatprep.subr.mxu0 0.0
        %736 = vmatpush1.msra.mxu0 0.0
        %737 = vmatprep.subr.mxu0 0.0
        %738 = vmatpush1.msra.mxu0 0.0
        %739 = vmatprep.subr.mxu0 0.0
        %740 = vmatpush1.msra.mxu0 0.0
        %741 = vmatprep.subr.mxu0 0.0
        %742 = vmatpush1.msra.mxu0 0.0
        %743 = vmatprep.mubr.f32.mxu0 0.0
        %744 = vmatmul.mubr.f32.gmra.mrb[0].mxu0 %v673
        %v745 = vpop.f32.mrb[0].mxu0
        %v746 = vadd.f32 0.0, %v745
        %v747 = vpop.f32.mrb[0].mxu0
        %v748 = vadd.f32 0.0, %v747
        %749 = vdwg.mxu0
        %v750 = vadd.f32 %v652, %v746
        %v751 = vadd.f32 %v653, %v748
        %752 = vrot.lane.b32.xlu0 %v223, 127
        %v753 = vpop.permute.xlu0 %752
        %754 = vrot.lane.b32.xlu0 %v225, 127
        %v755 = vpop.permute.xlu0 %754
        %vm756 = vcmask 1039360
        %v757 = vsel %vm756, %v753, %v755
        %v760 = vsel %vm756, %v755, 0.0
        %s761 = scalar_lea.vmem %s4, 10
        %v762 = vld [vmem:[%s761] sm:$0x3]
        %v764 = vlaneseq
        %v765 = vshrl.u32 %v764, 7
        %v766 = vsub.s32 0, %v765
        %v767 = vrot.slane %v762, %v766
        %v768 = vlaneseq
        %v769 = vshrl.u32 %v768, 7
        %v770 = vsub.s32 1, %v769
        %v771 = vrot.slane %v762, %v770
        %v774 = vmul.f32 %v757, %v767
        %v775 = vmul.f32 %v760, %v771
        %s776 = scalar_lea.vmem %s1, 40
        %v777 = vld [vmem:[%s776] sm:$0xff]
        %v779 = vsel %vm276, %v777, 0
        %v782 = vsel %vm280, %v774, 0
        %v785 = vsel %vm280, %v775, 0
        %787 = vmatprep.subr.mxu0 %v785
        %788 = vmatpush1.msra.mxu0 %v782
        %789 = vmatprep.subr.mxu0 0.0
        %790 = vmatpush1.msra.mxu0 0.0
        %791 = vmatprep.subr.mxu0 0.0
        %792 = vmatpush1.msra.mxu0 0.0
        %793 = vmatprep.subr.mxu0 0.0
        %794 = vmatpush1.msra.mxu0 0.0
        %795 = vmatprep.subr.mxu0 0.0
        %796 = vmatpush1.msra.mxu0 0.0
        %797 = vmatprep.subr.mxu0 0.0
        %798 = vmatpush1.msra.mxu0 0.0
        %799 = vmatprep.subr.mxu0 0.0
        %800 = vmatpush1.msra.mxu0 0.0
        %801 = vmatprep.subr.mxu0 0.0
        %802 = vmatpush1.msra.mxu0 0.0
        %803 = vmatprep.subr.mxu0 0.0
        %804 = vmatpush1.msra.mxu0 0.0
        %805 = vmatprep.subr.mxu0 0.0
        %806 = vmatpush1.msra.mxu0 0.0
        %807 = vmatprep.subr.mxu0 0.0
        %808 = vmatpush1.msra.mxu0 0.0
        %809 = vmatprep.subr.mxu0 0.0
        %810 = vmatpush1.msra.mxu0 0.0
        %811 = vmatprep.subr.mxu0 0.0
        %812 = vmatpush1.msra.mxu0 0.0
        %813 = vmatprep.subr.mxu0 0.0
        %814 = vmatpush1.msra.mxu0 0.0
        %815 = vmatprep.subr.mxu0 0.0
        %816 = vmatpush1.msra.mxu0 0.0
        %817 = vmatprep.subr.mxu0 0.0
        %818 = vmatpush1.msra.mxu0 0.0
        %819 = vmatprep.subr.mxu0 0.0
        %820 = vmatpush1.msra.mxu0 0.0
        %821 = vmatprep.subr.mxu0 0.0
        %822 = vmatpush1.msra.mxu0 0.0
        %823 = vmatprep.subr.mxu0 0.0
        %824 = vmatpush1.msra.mxu0 0.0
        %825 = vmatprep.subr.mxu0 0.0
        %826 = vmatpush1.msra.mxu0 0.0
        %827 = vmatprep.subr.mxu0 0.0
        %828 = vmatpush1.msra.mxu0 0.0
        %829 = vmatprep.subr.mxu0 0.0
        %830 = vmatpush1.msra.mxu0 0.0
        %831 = vmatprep.subr.mxu0 0.0
        %832 = vmatpush1.msra.mxu0 0.0
        %833 = vmatprep.subr.mxu0 0.0
        %834 = vmatpush1.msra.mxu0 0.0
        %835 = vmatprep.subr.mxu0 0.0
        %836 = vmatpush1.msra.mxu0 0.0
        %837 = vmatprep.subr.mxu0 0.0
        %838 = vmatpush1.msra.mxu0 0.0
        %839 = vmatprep.subr.mxu0 0.0
        %840 = vmatpush1.msra.mxu0 0.0
        %841 = vmatprep.subr.mxu0 0.0
        %842 = vmatpush1.msra.mxu0 0.0
        %843 = vmatprep.subr.mxu0 0.0
        %844 = vmatpush1.msra.mxu0 0.0
        %845 = vmatprep.subr.mxu0 0.0
        %846 = vmatpush1.msra.mxu0 0.0
        %847 = vmatprep.subr.mxu0 0.0
        %848 = vmatpush1.msra.mxu0 0.0
        %849 = vmatprep.subr.mxu0 0.0
        %850 = vmatpush1.msra.mxu0 0.0
        %851 = vmatprep.mubr.f32.mxu0 0.0
        %852 = vmatmul.mubr.f32.gmra.mrb[0].mxu0 %v779
        %v853 = vpop.f32.mrb[0].mxu0
        %v854 = vadd.f32 0.0, %v853
        %v855 = vpop.f32.mrb[0].mxu0
        %v856 = vadd.f32 0.0, %v855
        %857 = vdwg.mxu0
        %v858 = vadd.f32 %v750, %v854
        %v859 = vadd.f32 %v751, %v856
        %860 = vrot.lane.b32.xlu0 %v223, 113
        %v861 = vpop.permute.xlu0 %860
        %862 = vrot.lane.b32.xlu0 %v225, 113
        %v863 = vpop.permute.xlu0 %862
        %vm864 = vcmask 924672
        %v865 = vsel %vm864, %v861, %v863
        %v868 = vsel %vm864, %v863, 0.0
        %s869 = scalar_lea.vmem %s4, 12
        %v870 = vld [vmem:[%s869] sm:$0x3]
        %v872 = vlaneseq
        %v873 = vshrl.u32 %v872, 7
        %v874 = vsub.s32 0, %v873
        %v875 = vrot.slane %v870, %v874
        %v876 = vlaneseq
        %v877 = vshrl.u32 %v876, 7
        %v878 = vsub.s32 1, %v877
        %v879 = vrot.slane %v870, %v878
        %v882 = vmul.f32 %v865, %v875
        %v883 = vmul.f32 %v868, %v879
        %s884 = scalar_lea.vmem %s1, 48
        %v885 = vld [vmem:[%s884] sm:$0xff]
        %v887 = vsel %vm276, %v885, 0
        %v890 = vsel %vm280, %v882, 0
        %v893 = vsel %vm280, %v883, 0
        %895 = vmatprep.subr.mxu0 %v893
        %896 = vmatpush1.msra.mxu0 %v890
        %897 = vmatprep.subr.mxu0 0.0
        %898 = vmatpush1.msra.mxu0 0.0
        %899 = vmatprep.subr.mxu0 0.0
        %900 = vmatpush1.msra.mxu0 0.0
        %901 = vmatprep.subr.mxu0 0.0
        %902 = vmatpush1.msra.mxu0 0.0
        %903 = vmatprep.subr.mxu0 0.0
        %904 = vmatpush1.msra.mxu0 0.0
        %905 = vmatprep.subr.mxu0 0.0
        %906 = vmatpush1.msra.mxu0 0.0
        %907 = vmatprep.subr.mxu0 0.0
        %908 = vmatpush1.msra.mxu0 0.0
        %909 = vmatprep.subr.mxu0 0.0
        %910 = vmatpush1.msra.mxu0 0.0
        %911 = vmatprep.subr.mxu0 0.0
        %912 = vmatpush1.msra.mxu0 0.0
        %913 = vmatprep.subr.mxu0 0.0
        %914 = vmatpush1.msra.mxu0 0.0
        %915 = vmatprep.subr.mxu0 0.0
        %916 = vmatpush1.msra.mxu0 0.0
        %917 = vmatprep.subr.mxu0 0.0
        %918 = vmatpush1.msra.mxu0 0.0
        %919 = vmatprep.subr.mxu0 0.0
        %920 = vmatpush1.msra.mxu0 0.0
        %921 = vmatprep.subr.mxu0 0.0
        %922 = vmatpush1.msra.mxu0 0.0
        %923 = vmatprep.subr.mxu0 0.0
        %924 = vmatpush1.msra.mxu0 0.0
        %925 = vmatprep.subr.mxu0 0.0
        %926 = vmatpush1.msra.mxu0 0.0
        %927 = vmatprep.subr.mxu0 0.0
        %928 = vmatpush1.msra.mxu0 0.0
        %929 = vmatprep.subr.mxu0 0.0
        %930 = vmatpush1.msra.mxu0 0.0
        %931 = vmatprep.subr.mxu0 0.0
        %932 = vmatpush1.msra.mxu0 0.0
        %933 = vmatprep.subr.mxu0 0.0
        %934 = vmatpush1.msra.mxu0 0.0
        %935 = vmatprep.subr.mxu0 0.0
        %936 = vmatpush1.msra.mxu0 0.0
        %937 = vmatprep.subr.mxu0 0.0
        %938 = vmatpush1.msra.mxu0 0.0
        %939 = vmatprep.subr.mxu0 0.0
        %940 = vmatpush1.msra.mxu0 0.0
        %941 = vmatprep.subr.mxu0 0.0
        %942 = vmatpush1.msra.mxu0 0.0
        %943 = vmatprep.subr.mxu0 0.0
        %944 = vmatpush1.msra.mxu0 0.0
        %945 = vmatprep.subr.mxu0 0.0
        %946 = vmatpush1.msra.mxu0 0.0
        %947 = vmatprep.subr.mxu0 0.0
        %948 = vmatpush1.msra.mxu0 0.0
        %949 = vmatprep.subr.mxu0 0.0
        %950 = vmatpush1.msra.mxu0 0.0
        %951 = vmatprep.subr.mxu0 0.0
        %952 = vmatpush1.msra.mxu0 0.0
        %953 = vmatprep.subr.mxu0 0.0
        %954 = vmatpush1.msra.mxu0 0.0
        %955 = vmatprep.subr.mxu0 0.0
        %956 = vmatpush1.msra.mxu0 0.0
        %957 = vmatprep.subr.mxu0 0.0
        %958 = vmatpush1.msra.mxu0 0.0
        %959 = vmatprep.mubr.f32.mxu0 0.0
        %960 = vmatmul.mubr.f32.gmra.mrb[0].mxu0 %v887
        %v961 = vpop.f32.mrb[0].mxu0
        %v962 = vadd.f32 0.0, %v961
        %v963 = vpop.f32.mrb[0].mxu0
        %v964 = vadd.f32 0.0, %v963
        %965 = vdwg.mxu0
        %v966 = vadd.f32 %v858, %v962
        %v967 = vadd.f32 %v859, %v964
        %968 = vrot.lane.b32.xlu0 %v223, 112
        %v969 = vpop.permute.xlu0 %968
        %970 = vrot.lane.b32.xlu0 %v225, 112
        %v971 = vpop.permute.xlu0 %970
        %vm972 = vcmask 916480
        %v973 = vsel %vm972, %v969, %v971
        %v976 = vsel %vm972, %v971, 0.0
        %s977 = scalar_lea.vmem %s4, 14
        %v978 = vld [vmem:[%s977] sm:$0x3]
        %v980 = vlaneseq
        %v981 = vshrl.u32 %v980, 7
        %v982 = vsub.s32 0, %v981
        %v983 = vrot.slane %v978, %v982
        %v984 = vlaneseq
        %v985 = vshrl.u32 %v984, 7
        %v986 = vsub.s32 1, %v985
        %v987 = vrot.slane %v978, %v986
        %v990 = vmul.f32 %v973, %v983
        %v991 = vmul.f32 %v976, %v987
        %s992 = scalar_lea.vmem %s1, 56
        %v993 = vld [vmem:[%s992] sm:$0xff]
        %v995 = vsel %vm276, %v993, 0
        %v998 = vsel %vm280, %v990, 0
        %v1001 = vsel %vm280, %v991, 0
        %1003 = vmatprep.subr.mxu0 %v1001
        %1004 = vmatpush1.msra.mxu0 %v998
        %1005 = vmatprep.subr.mxu0 0.0
        %1006 = vmatpush1.msra.mxu0 0.0
        %1007 = vmatprep.subr.mxu0 0.0
        %1008 = vmatpush1.msra.mxu0 0.0
        %1009 = vmatprep.subr.mxu0 0.0
        %1010 = vmatpush1.msra.mxu0 0.0
        %1011 = vmatprep.subr.mxu0 0.0
        %1012 = vmatpush1.msra.mxu0 0.0
        %1013 = vmatprep.subr.mxu0 0.0
        %1014 = vmatpush1.msra.mxu0 0.0
        %1015 = vmatprep.subr.mxu0 0.0
        %1016 = vmatpush1.msra.mxu0 0.0
        %1017 = vmatprep.subr.mxu0 0.0
        %1018 = vmatpush1.msra.mxu0 0.0
        %1019 = vmatprep.subr.mxu0 0.0
        %1020 = vmatpush1.msra.mxu0 0.0
        %1021 = vmatprep.subr.mxu0 0.0
        %1022 = vmatpush1.msra.mxu0 0.0
        %1023 = vmatprep.subr.mxu0 0.0
        %1024 = vmatpush1.msra.mxu0 0.0
        %1025 = vmatprep.subr.mxu0 0.0
        %1026 = vmatpush1.msra.mxu0 0.0
        %1027 = vmatprep.subr.mxu0 0.0
        %1028 = vmatpush1.msra.mxu0 0.0
        %1029 = vmatprep.subr.mxu0 0.0
        %1030 = vmatpush1.msra.mxu0 0.0
        %1031 = vmatprep.subr.mxu0 0.0
        %1032 = vmatpush1.msra.mxu0 0.0
        %1033 = vmatprep.subr.mxu0 0.0
        %1034 = vmatpush1.msra.mxu0 0.0
        %1035 = vmatprep.subr.mxu0 0.0
        %1036 = vmatpush1.msra.mxu0 0.0
        %1037 = vmatprep.subr.mxu0 0.0
        %1038 = vmatpush1.msra.mxu0 0.0
        %1039 = vmatprep.subr.mxu0 0.0
        %1040 = vmatpush1.msra.mxu0 0.0
        %1041 = vmatprep.subr.mxu0 0.0
        %1042 = vmatpush1.msra.mxu0 0.0
        %1043 = vmatprep.subr.mxu0 0.0
        %1044 = vmatpush1.msra.mxu0 0.0
        %1045 = vmatprep.subr.mxu0 0.0
        %1046 = vmatpush1.msra.mxu0 0.0
        %1047 = vmatprep.subr.mxu0 0.0
        %1048 = vmatpush1.msra.mxu0 0.0
        %1049 = vmatprep.subr.mxu0 0.0
        %1050 = vmatpush1.msra.mxu0 0.0
        %1051 = vmatprep.subr.mxu0 0.0
        %1052 = vmatpush1.msra.mxu0 0.0
        %1053 = vmatprep.subr.mxu0 0.0
        %1054 = vmatpush1.msra.mxu0 0.0
        %1055 = vmatprep.subr.mxu0 0.0
        %1056 = vmatpush1.msra.mxu0 0.0
        %1057 = vmatprep.subr.mxu0 0.0
        %1058 = vmatpush1.msra.mxu0 0.0
        %1059 = vmatprep.subr.mxu0 0.0
        %1060 = vmatpush1.msra.mxu0 0.0
        %1061 = vmatprep.subr.mxu0 0.0
        %1062 = vmatpush1.msra.mxu0 0.0
        %1063 = vmatprep.subr.mxu0 0.0
        %1064 = vmatpush1.msra.mxu0 0.0
        %1065 = vmatprep.subr.mxu0 0.0
        %1066 = vmatpush1.msra.mxu0 0.0
        %1067 = vmatprep.mubr.f32.mxu0 0.0
        %1068 = vmatmul.mubr.f32.gmra.mrb[0].mxu0 %v995
        %v1069 = vpop.f32.mrb[0].mxu0
        %v1070 = vadd.f32 0.0, %v1069
        %v1071 = vpop.f32.mrb[0].mxu0
        %v1072 = vadd.f32 0.0, %v1071
        %1073 = vdwg.mxu0
        %v1074 = vadd.f32 %v966, %v1070
        %v1075 = vadd.f32 %v967, %v1072
        %1076 = vrot.lane.b32.xlu0 %v223, 111
        %v1077 = vpop.permute.xlu0 %1076
        %1078 = vrot.lane.b32.xlu0 %v225, 111
        %v1079 = vpop.permute.xlu0 %1078
        %vm1080 = vcmask 908288
        %v1081 = vsel %vm1080, %v1077, %v1079
        %v1084 = vsel %vm1080, %v1079, 0.0
        %s1085 = scalar_lea.vmem %s4, 16
        %v1086 = vld [vmem:[%s1085] sm:$0x3]
        %v1088 = vlaneseq
        %v1089 = vshrl.u32 %v1088, 7
        %v1090 = vsub.s32 0, %v1089
        %v1091 = vrot.slane %v1086, %v1090
        %v1092 = vlaneseq
        %v1093 = vshrl.u32 %v1092, 7
        %v1094 = vsub.s32 1, %v1093
        %v1095 = vrot.slane %v1086, %v1094
        %v1098 = vmul.f32 %v1081, %v1091
        %v1099 = vmul.f32 %v1084, %v1095
        %s1100 = scalar_lea.vmem %s1, 64
        %v1101 = vld [vmem:[%s1100] sm:$0xff]
        %v1103 = vsel %vm276, %v1101, 0
        %v1106 = vsel %vm280, %v1098, 0
        %v1109 = vsel %vm280, %v1099, 0
        %1111 = vmatprep.subr.mxu0 %v1109
        %1112 = vmatpush1.msra.mxu0 %v1106
        %1113 = vmatprep.subr.mxu0 0.0
        %1114 = vmatpush1.msra.mxu0 0.0
        %1115 = vmatprep.subr.mxu0 0.0
        %1116 = vmatpush1.msra.mxu0 0.0
        %1117 = vmatprep.subr.mxu0 0.0
        %1118 = vmatpush1.msra.mxu0 0.0
        %1119 = vmatprep.subr.mxu0 0.0
        %1120 = vmatpush1.msra.mxu0 0.0
        %1121 = vmatprep.subr.mxu0 0.0
        %1122 = vmatpush1.msra.mxu0 0.0
        %1123 = vmatprep.subr.mxu0 0.0
        %1124 = vmatpush1.msra.mxu0 0.0
        %1125 = vmatprep.subr.mxu0 0.0
        %1126 = vmatpush1.msra.mxu0 0.0
        %1127 = vmatprep.subr.mxu0 0.0
        %1128 = vmatpush1.msra.mxu0 0.0
        %1129 = vmatprep.subr.mxu0 0.0
        %1130 = vmatpush1.msra.mxu0 0.0
        %1131 = vmatprep.subr.mxu0 0.0
        %1132 = vmatpush1.msra.mxu0 0.0
        %1133 = vmatprep.subr.mxu0 0.0
        %1134 = vmatpush1.msra.mxu0 0.0
        %1135 = vmatprep.subr.mxu0 0.0
        %1136 = vmatpush1.msra.mxu0 0.0
        %1137 = vmatprep.subr.mxu0 0.0
        %1138 = vmatpush1.msra.mxu0 0.0
        %1139 = vmatprep.subr.mxu0 0.0
        %1140 = vmatpush1.msra.mxu0 0.0
        %1141 = vmatprep.subr.mxu0 0.0
        %1142 = vmatpush1.msra.mxu0 0.0
        %1143 = vmatprep.subr.mxu0 0.0
        %1144 = vmatpush1.msra.mxu0 0.0
        %1145 = vmatprep.subr.mxu0 0.0
        %1146 = vmatpush1.msra.mxu0 0.0
        %1147 = vmatprep.subr.mxu0 0.0
        %1148 = vmatpush1.msra.mxu0 0.0
        %1149 = vmatprep.subr.mxu0 0.0
        %1150 = vmatpush1.msra.mxu0 0.0
        %1151 = vmatprep.subr.mxu0 0.0
        %1152 = vmatpush1.msra.mxu0 0.0
        %1153 = vmatprep.subr.mxu0 0.0
        %1154 = vmatpush1.msra.mxu0 0.0
        %1155 = vmatprep.subr.mxu0 0.0
        %1156 = vmatpush1.msra.mxu0 0.0
        %1157 = vmatprep.subr.mxu0 0.0
        %1158 = vmatpush1.msra.mxu0 0.0
        %1159 = vmatprep.subr.mxu0 0.0
        %1160 = vmatpush1.msra.mxu0 0.0
        %1161 = vmatprep.subr.mxu0 0.0
        %1162 = vmatpush1.msra.mxu0 0.0
        %1163 = vmatprep.subr.mxu0 0.0
        %1164 = vmatpush1.msra.mxu0 0.0
        %1165 = vmatprep.subr.mxu0 0.0
        %1166 = vmatpush1.msra.mxu0 0.0
        %1167 = vmatprep.subr.mxu0 0.0
        %1168 = vmatpush1.msra.mxu0 0.0
        %1169 = vmatprep.subr.mxu0 0.0
        %1170 = vmatpush1.msra.mxu0 0.0
        %1171 = vmatprep.subr.mxu0 0.0
        %1172 = vmatpush1.msra.mxu0 0.0
        %1173 = vmatprep.subr.mxu0 0.0
        %1174 = vmatpush1.msra.mxu0 0.0
        %1175 = vmatprep.mubr.f32.mxu0 0.0
        %1176 = vmatmul.mubr.f32.gmra.mrb[0].mxu0 %v1103
        %v1177 = vpop.f32.mrb[0].mxu0
        %v1178 = vadd.f32 0.0, %v1177
        %v1179 = vpop.f32.mrb[0].mxu0
        %v1180 = vadd.f32 0.0, %v1179
        %1181 = vdwg.mxu0
        %v1182 = vadd.f32 %v1074, %v1178
        %v1183 = vadd.f32 %v1075, %v1180
        %v1184 = vld [vmem:[%s2] sm:$0xff]
        %1186 = vset.pattern.permute.xlu0 0
        %1187 = vperm.xlu0 %1186, %v1184
        %v1188 = vpop.permute.xlu0 %1187
        %v1190 = vadd.f32 %v1182, %v1188
        %v1191 = vadd.f32 %v1183, %v1188
        %v1192 = vmax.f32 %v1190, 0.0
        %v1193 = vmax.f32 %v1191, 0.0
        %1196 = vrot.lane.b32.xlu0 %v1192, 17
        %v1197 = vpop.permute.xlu0 %1196
        %1198 = vrot.lane.b32.xlu0 %v1193, 17
        %v1199 = vpop.permute.xlu0 %1198
        %v1200 = vsel %vm230, %v1197, %v1199
        %v1203 = vsel %vm230, 0.0, %v1197
        %v1204 = vmul.f32 %v1203, %v240
        %v1205 = vmul.f32 %v1200, %v244
        %v1206 = vld [vmem:[%s3] sm:$0xf]
        %1207 = vrot.lane.b32.xlu0 %v1192, 16
        %v1208 = vpop.permute.xlu0 %1207
        %1209 = vrot.lane.b32.xlu0 %v1193, 16
        %v1210 = vpop.permute.xlu0 %1209
        %v1211 = vsel %vm254, %v1208, %v1210
        %v1214 = vsel %vm254, 0.0, %v1208
        %v1215 = vmul.f32 %v1214, %v265
        %v1216 = vmul.f32 %v1211, %v269
        %s1217 = scalar_lea.vmem %s3, 4
        %v1218 = vld [vmem:[%s1217] sm:$0xf]
        %vm1219 = vcmask 64512
        %v1221 = vsel %vm1219, %v1218, 0
        %1223 = vmatprep.subr.mxu0 %v1216
        %1224 = vmatpush1.msra.mxu0 %v1215
        %1225 = vmatprep.subr.mxu0 0.0
        %1226 = vmatpush1.msra.mxu0 0.0
        %1227 = vmatprep.subr.mxu0 0.0
        %1228 = vmatpush1.msra.mxu0 0.0
        %1229 = vmatprep.subr.mxu0 0.0
        %1230 = vmatpush1.msra.mxu0 0.0
        %1231 = vmatprep.subr.mxu0 0.0
        %1232 = vmatpush1.msra.mxu0 0.0
        %1233 = vmatprep.subr.mxu0 0.0
        %1234 = vmatpush1.msra.mxu0 0.0
        %1235 = vmatprep.subr.mxu0 0.0
        %1236 = vmatpush1.msra.mxu0 0.0
        %1237 = vmatprep.subr.mxu0 0.0
        %1238 = vmatpush1.msra.mxu0 0.0
        %1239 = vmatprep.subr.mxu0 0.0
        %1240 = vmatpush1.msra.mxu0 0.0
        %1241 = vmatprep.subr.mxu0 0.0
        %1242 = vmatpush1.msra.mxu0 0.0
        %1243 = vmatprep.subr.mxu0 0.0
        %1244 = vmatpush1.msra.mxu0 0.0
        %1245 = vmatprep.subr.mxu0 0.0
        %1246 = vmatpush1.msra.mxu0 0.0
        %1247 = vmatprep.subr.mxu0 0.0
        %1248 = vmatpush1.msra.mxu0 0.0
        %1249 = vmatprep.subr.mxu0 0.0
        %1250 = vmatpush1.msra.mxu0 0.0
        %1251 = vmatprep.subr.mxu0 0.0
        %1252 = vmatpush1.msra.mxu0 0.0
        %1253 = vmatprep.subr.mxu0 0.0
        %1254 = vmatpush1.msra.mxu0 0.0
        %1255 = vmatprep.subr.mxu0 0.0
        %1256 = vmatpush1.msra.mxu0 0.0
        %1257 = vmatprep.subr.mxu0 0.0
        %1258 = vmatpush1.msra.mxu0 0.0
        %1259 = vmatprep.subr.mxu0 0.0
        %1260 = vmatpush1.msra.mxu0 0.0
        %1261 = vmatprep.subr.mxu0 0.0
        %1262 = vmatpush1.msra.mxu0 0.0
        %1263 = vmatprep.subr.mxu0 0.0
        %1264 = vmatpush1.msra.mxu0 0.0
        %1265 = vmatprep.subr.mxu0 0.0
        %1266 = vmatpush1.msra.mxu0 0.0
        %1267 = vmatprep.subr.mxu0 0.0
        %1268 = vmatpush1.msra.mxu0 0.0
        %1269 = vmatprep.subr.mxu0 0.0
        %1270 = vmatpush1.msra.mxu0 0.0
        %1271 = vmatprep.subr.mxu0 0.0
        %1272 = vmatpush1.msra.mxu0 0.0
        %1273 = vmatprep.subr.mxu0 0.0
        %1274 = vmatpush1.msra.mxu0 0.0
        %1275 = vmatprep.subr.mxu0 0.0
        %1276 = vmatpush1.msra.mxu0 0.0
        %1277 = vmatprep.subr.mxu0 0.0
        %1278 = vmatpush1.msra.mxu0 0.0
        %1279 = vmatprep.subr.mxu0 0.0
        %1280 = vmatpush1.msra.mxu0 0.0
        %1281 = vmatprep.subr.mxu0 0.0
        %1282 = vmatpush1.msra.mxu0 0.0
        %1283 = vmatprep.subr.mxu0 0.0
        %1284 = vmatpush1.msra.mxu0 0.0
        %1285 = vmatprep.subr.mxu0 0.0
        %1286 = vmatpush1.msra.mxu0 0.0
        %1287 = vmatprep.mubr.f32.mxu0 0.0
        %1288 = vmatmul.mubr.f32.gmra.mrb[0].mxu0 %v1221
        %v1289 = vpop.f32.mrb[0].mxu0
        %v1290 = vadd.f32 0.0, %v1289
        %v1291 = vpop.f32.mrb[0].mxu0
        %v1292 = vadd.f32 0.0, %v1291
        %1293 = vdwg.mxu0
        %v1295 = vsel %vm1219, %v1206, 0
        %1297 = vmatprep.subr.mxu0 %v1205
        %1298 = vmatpush1.msra.mxu0 %v1204
        %1299 = vmatprep.subr.mxu0 0.0
        %1300 = vmatpush1.msra.mxu0 0.0
        %1301 = vmatprep.subr.mxu0 0.0
        %1302 = vmatpush1.msra.mxu0 0.0
        %1303 = vmatprep.subr.mxu0 0.0
        %1304 = vmatpush1.msra.mxu0 0.0
        %1305 = vmatprep.subr.mxu0 0.0
        %1306 = vmatpush1.msra.mxu0 0.0
        %1307 = vmatprep.subr.mxu0 0.0
        %1308 = vmatpush1.msra.mxu0 0.0
        %1309 = vmatprep.subr.mxu0 0.0
        %1310 = vmatpush1.msra.mxu0 0.0
        %1311 = vmatprep.subr.mxu0 0.0
        %1312 = vmatpush1.msra.mxu0 0.0
        %1313 = vmatprep.subr.mxu0 0.0
        %1314 = vmatpush1.msra.mxu0 0.0
        %1315 = vmatprep.subr.mxu0 0.0
        %1316 = vmatpush1.msra.mxu0 0.0
        %1317 = vmatprep.subr.mxu0 0.0
        %1318 = vmatpush1.msra.mxu0 0.0
        %1319 = vmatprep.subr.mxu0 0.0
        %1320 = vmatpush1.msra.mxu0 0.0
        %1321 = vmatprep.subr.mxu0 0.0
        %1322 = vmatpush1.msra.mxu0 0.0
        %1323 = vmatprep.subr.mxu0 0.0
        %1324 = vmatpush1.msra.mxu0 0.0
        %1325 = vmatprep.subr.mxu0 0.0
        %1326 = vmatpush1.msra.mxu0 0.0
        %1327 = vmatprep.subr.mxu0 0.0
        %1328 = vmatpush1.msra.mxu0 0.0
        %1329 = vmatprep.subr.mxu0 0.0
        %1330 = vmatpush1.msra.mxu0 0.0
        %1331 = vmatprep.subr.mxu0 0.0
        %1332 = vmatpush1.msra.mxu0 0.0
        %1333 = vmatprep.subr.mxu0 0.0
        %1334 = vmatpush1.msra.mxu0 0.0
        %1335 = vmatprep.subr.mxu0 0.0
        %1336 = vmatpush1.msra.mxu0 0.0
        %1337 = vmatprep.subr.mxu0 0.0
        %1338 = vmatpush1.msra.mxu0 0.0
        %1339 = vmatprep.subr.mxu0 0.0
        %1340 = vmatpush1.msra.mxu0 0.0
        %1341 = vmatprep.subr.mxu0 0.0
        %1342 = vmatpush1.msra.mxu0 0.0
        %1343 = vmatprep.subr.mxu0 0.0
        %1344 = vmatpush1.msra.mxu0 0.0
        %1345 = vmatprep.subr.mxu0 0.0
        %1346 = vmatpush1.msra.mxu0 0.0
        %1347 = vmatprep.subr.mxu0 0.0
        %1348 = vmatpush1.msra.mxu0 0.0
        %1349 = vmatprep.subr.mxu0 0.0
        %1350 = vmatpush1.msra.mxu0 0.0
        %1351 = vmatprep.subr.mxu0 0.0
        %1352 = vmatpush1.msra.mxu0 0.0
        %1353 = vmatprep.subr.mxu0 0.0
        %1354 = vmatpush1.msra.mxu0 0.0
        %1355 = vmatprep.subr.mxu0 0.0
        %1356 = vmatpush1.msra.mxu0 0.0
        %1357 = vmatprep.subr.mxu0 0.0
        %1358 = vmatpush1.msra.mxu0 0.0
        %1359 = vmatprep.subr.mxu0 0.0
        %1360 = vmatpush1.msra.mxu0 0.0
        %1361 = vmatprep.mubr.f32.mxu0 0.0
        %1362 = vmatmul.mubr.f32.gmra.mrb[0].mxu0 %v1295
        %v1363 = vpop.f32.mrb[0].mxu0
        %v1364 = vadd.f32 %v1290, %v1363
        %v1365 = vpop.f32.mrb[0].mxu0
        %v1366 = vadd.f32 %v1292, %v1365
        %1367 = vdwg.mxu0
        %1368 = vrot.lane.b32.xlu0 %v1192, 15
        %v1369 = vpop.permute.xlu0 %1368
        %1370 = vrot.lane.b32.xlu0 %v1193, 15
        %v1371 = vpop.permute.xlu0 %1370
        %v1372 = vsel %vm442, %v1369, %v1371
        %v1375 = vsel %vm442, 0.0, %v1369
        %v1376 = vmul.f32 %v1375, %v453
        %v1377 = vmul.f32 %v1372, %v457
        %s1378 = scalar_lea.vmem %s3, 8
        %v1379 = vld [vmem:[%s1378] sm:$0xf]
        %v1381 = vsel %vm1219, %v1379, 0
        %1383 = vmatprep.subr.mxu0 %v1377
        %1384 = vmatpush1.msra.mxu0 %v1376
        %1385 = vmatprep.subr.mxu0 0.0
        %1386 = vmatpush1.msra.mxu0 0.0
        %1387 = vmatprep.subr.mxu0 0.0
        %1388 = vmatpush1.msra.mxu0 0.0
        %1389 = vmatprep.subr.mxu0 0.0
        %1390 = vmatpush1.msra.mxu0 0.0
        %1391 = vmatprep.subr.mxu0 0.0
        %1392 = vmatpush1.msra.mxu0 0.0
        %1393 = vmatprep.subr.mxu0 0.0
        %1394 = vmatpush1.msra.mxu0 0.0
        %1395 = vmatprep.subr.mxu0 0.0
        %1396 = vmatpush1.msra.mxu0 0.0
        %1397 = vmatprep.subr.mxu0 0.0
        %1398 = vmatpush1.msra.mxu0 0.0
        %1399 = vmatprep.subr.mxu0 0.0
        %1400 = vmatpush1.msra.mxu0 0.0
        %1401 = vmatprep.subr.mxu0 0.0
        %1402 = vmatpush1.msra.mxu0 0.0
        %1403 = vmatprep.subr.mxu0 0.0
        %1404 = vmatpush1.msra.mxu0 0.0
        %1405 = vmatprep.subr.mxu0 0.0
        %1406 = vmatpush1.msra.mxu0 0.0
        %1407 = vmatprep.subr.mxu0 0.0
        %1408 = vmatpush1.msra.mxu0 0.0
        %1409 = vmatprep.subr.mxu0 0.0
        %1410 = vmatpush1.msra.mxu0 0.0
        %1411 = vmatprep.subr.mxu0 0.0
        %1412 = vmatpush1.msra.mxu0 0.0
        %1413 = vmatprep.subr.mxu0 0.0
        %1414 = vmatpush1.msra.mxu0 0.0
        %1415 = vmatprep.subr.mxu0 0.0
        %1416 = vmatpush1.msra.mxu0 0.0
        %1417 = vmatprep.subr.mxu0 0.0
        %1418 = vmatpush1.msra.mxu0 0.0
        %1419 = vmatprep.subr.mxu0 0.0
        %1420 = vmatpush1.msra.mxu0 0.0
        %1421 = vmatprep.subr.mxu0 0.0
        %1422 = vmatpush1.msra.mxu0 0.0
        %1423 = vmatprep.subr.mxu0 0.0
        %1424 = vmatpush1.msra.mxu0 0.0
        %1425 = vmatprep.subr.mxu0 0.0
        %1426 = vmatpush1.msra.mxu0 0.0
        %1427 = vmatprep.subr.mxu0 0.0
        %1428 = vmatpush1.msra.mxu0 0.0
        %1429 = vmatprep.subr.mxu0 0.0
        %1430 = vmatpush1.msra.mxu0 0.0
        %1431 = vmatprep.subr.mxu0 0.0
        %1432 = vmatpush1.msra.mxu0 0.0
        %1433 = vmatprep.subr.mxu0 0.0
        %1434 = vmatpush1.msra.mxu0 0.0
        %1435 = vmatprep.subr.mxu0 0.0
        %1436 = vmatpush1.msra.mxu0 0.0
        %1437 = vmatprep.subr.mxu0 0.0
        %1438 = vmatpush1.msra.mxu0 0.0
        %1439 = vmatprep.subr.mxu0 0.0
        %1440 = vmatpush1.msra.mxu0 0.0
        %1441 = vmatprep.subr.mxu0 0.0
        %1442 = vmatpush1.msra.mxu0 0.0
        %1443 = vmatprep.subr.mxu0 0.0
        %1444 = vmatpush1.msra.mxu0 0.0
        %1445 = vmatprep.subr.mxu0 0.0
        %1446 = vmatpush1.msra.mxu0 0.0
        %1447 = vmatprep.mubr.f32.mxu0 0.0
        %1448 = vmatmul.mubr.f32.gmra.mrb[0].mxu0 %v1381
        %v1449 = vpop.f32.mrb[0].mxu0
        %v1450 = vadd.f32 0.0, %v1449
        %v1451 = vpop.f32.mrb[0].mxu0
        %v1452 = vadd.f32 0.0, %v1451
        %1453 = vdwg.mxu0
        %v1454 = vadd.f32 %v1364, %v1450
        %v1455 = vadd.f32 %v1366, %v1452
        %1456 = vrot.lane.b32.xlu0 %v1192, 1
        %v1457 = vpop.permute.xlu0 %1456
        %1458 = vrot.lane.b32.xlu0 %v1193, 1
        %v1459 = vpop.permute.xlu0 %1458
        %v1460 = vsel %vm550, %v1457, %v1459
        %v1463 = vsel %vm550, 0.0, %v1457
        %v1464 = vmul.f32 %v1463, %v561
        %v1465 = vmul.f32 %v1460, %v565
        %s1466 = scalar_lea.vmem %s3, 12
        %v1467 = vld [vmem:[%s1466] sm:$0xf]
        %v1469 = vsel %vm1219, %v1467, 0
        %1471 = vmatprep.subr.mxu0 %v1465
        %1472 = vmatpush1.msra.mxu0 %v1464
        %1473 = vmatprep.subr.mxu0 0.0
        %1474 = vmatpush1.msra.mxu0 0.0
        %1475 = vmatprep.subr.mxu0 0.0
        %1476 = vmatpush1.msra.mxu0 0.0
        %1477 = vmatprep.subr.mxu0 0.0
        %1478 = vmatpush1.msra.mxu0 0.0
        %1479 = vmatprep.subr.mxu0 0.0
        %1480 = vmatpush1.msra.mxu0 0.0
        %1481 = vmatprep.subr.mxu0 0.0
        %1482 = vmatpush1.msra.mxu0 0.0
        %1483 = vmatprep.subr.mxu0 0.0
        %1484 = vmatpush1.msra.mxu0 0.0
        %1485 = vmatprep.subr.mxu0 0.0
        %1486 = vmatpush1.msra.mxu0 0.0
        %1487 = vmatprep.subr.mxu0 0.0
        %1488 = vmatpush1.msra.mxu0 0.0
        %1489 = vmatprep.subr.mxu0 0.0
        %1490 = vmatpush1.msra.mxu0 0.0
        %1491 = vmatprep.subr.mxu0 0.0
        %1492 = vmatpush1.msra.mxu0 0.0
        %1493 = vmatprep.subr.mxu0 0.0
        %1494 = vmatpush1.msra.mxu0 0.0
        %1495 = vmatprep.subr.mxu0 0.0
        %1496 = vmatpush1.msra.mxu0 0.0
        %1497 = vmatprep.subr.mxu0 0.0
        %1498 = vmatpush1.msra.mxu0 0.0
        %1499 = vmatprep.subr.mxu0 0.0
        %1500 = vmatpush1.msra.mxu0 0.0
        %1501 = vmatprep.subr.mxu0 0.0
        %1502 = vmatpush1.msra.mxu0 0.0
        %1503 = vmatprep.subr.mxu0 0.0
        %1504 = vmatpush1.msra.mxu0 0.0
        %1505 = vmatprep.subr.mxu0 0.0
        %1506 = vmatpush1.msra.mxu0 0.0
        %1507 = vmatprep.subr.mxu0 0.0
        %1508 = vmatpush1.msra.mxu0 0.0
        %1509 = vmatprep.subr.mxu0 0.0
        %1510 = vmatpush1.msra.mxu0 0.0
        %1511 = vmatprep.subr.mxu0 0.0
        %1512 = vmatpush1.msra.mxu0 0.0
        %1513 = vmatprep.subr.mxu0 0.0
        %1514 = vmatpush1.msra.mxu0 0.0
        %1515 = vmatprep.subr.mxu0 0.0
        %1516 = vmatpush1.msra.mxu0 0.0
        %1517 = vmatprep.subr.mxu0 0.0
        %1518 = vmatpush1.msra.mxu0 0.0
        %1519 = vmatprep.subr.mxu0 0.0
        %1520 = vmatpush1.msra.mxu0 0.0
        %1521 = vmatprep.subr.mxu0 0.0
        %1522 = vmatpush1.msra.mxu0 0.0
        %1523 = vmatprep.subr.mxu0 0.0
        %1524 = vmatpush1.msra.mxu0 0.0
        %1525 = vmatprep.subr.mxu0 0.0
        %1526 = vmatpush1.msra.mxu0 0.0
        %1527 = vmatprep.subr.mxu0 0.0
        %1528 = vmatpush1.msra.mxu0 0.0
        %1529 = vmatprep.subr.mxu0 0.0
        %1530 = vmatpush1.msra.mxu0 0.0
        %1531 = vmatprep.subr.mxu0 0.0
        %1532 = vmatpush1.msra.mxu0 0.0
        %1533 = vmatprep.subr.mxu0 0.0
        %1534 = vmatpush1.msra.mxu0 0.0
        %1535 = vmatprep.mubr.f32.mxu0 0.0
        %1536 = vmatmul.mubr.f32.gmra.mrb[0].mxu0 %v1469
        %v1537 = vpop.f32.mrb[0].mxu0
        %v1538 = vadd.f32 0.0, %v1537
        %v1539 = vpop.f32.mrb[0].mxu0
        %v1540 = vadd.f32 0.0, %v1539
        %1541 = vdwg.mxu0
        %v1542 = vadd.f32 %v1454, %v1538
        %v1543 = vadd.f32 %v1455, %v1540
        %v1546 = vmul.f32 %v1192, %v660
        %v1547 = vmul.f32 %v1193, %v664
        %s1548 = scalar_lea.vmem %s3, 16
        %v1549 = vld [vmem:[%s1548] sm:$0xf]
        %v1551 = vsel %vm1219, %v1549, 0
        %1553 = vmatprep.subr.mxu0 %v1547
        %1554 = vmatpush1.msra.mxu0 %v1546
        %1555 = vmatprep.subr.mxu0 0.0
        %1556 = vmatpush1.msra.mxu0 0.0
        %1557 = vmatprep.subr.mxu0 0.0
        %1558 = vmatpush1.msra.mxu0 0.0
        %1559 = vmatprep.subr.mxu0 0.0
        %1560 = vmatpush1.msra.mxu0 0.0
        %1561 = vmatprep.subr.mxu0 0.0
        %1562 = vmatpush1.msra.mxu0 0.0
        %1563 = vmatprep.subr.mxu0 0.0
        %1564 = vmatpush1.msra.mxu0 0.0
        %1565 = vmatprep.subr.mxu0 0.0
        %1566 = vmatpush1.msra.mxu0 0.0
        %1567 = vmatprep.subr.mxu0 0.0
        %1568 = vmatpush1.msra.mxu0 0.0
        %1569 = vmatprep.subr.mxu0 0.0
        %1570 = vmatpush1.msra.mxu0 0.0
        %1571 = vmatprep.subr.mxu0 0.0
        %1572 = vmatpush1.msra.mxu0 0.0
        %1573 = vmatprep.subr.mxu0 0.0
        %1574 = vmatpush1.msra.mxu0 0.0
        %1575 = vmatprep.subr.mxu0 0.0
        %1576 = vmatpush1.msra.mxu0 0.0
        %1577 = vmatprep.subr.mxu0 0.0
        %1578 = vmatpush1.msra.mxu0 0.0
        %1579 = vmatprep.subr.mxu0 0.0
        %1580 = vmatpush1.msra.mxu0 0.0
        %1581 = vmatprep.subr.mxu0 0.0
        %1582 = vmatpush1.msra.mxu0 0.0
        %1583 = vmatprep.subr.mxu0 0.0
        %1584 = vmatpush1.msra.mxu0 0.0
        %1585 = vmatprep.subr.mxu0 0.0
        %1586 = vmatpush1.msra.mxu0 0.0
        %1587 = vmatprep.subr.mxu0 0.0
        %1588 = vmatpush1.msra.mxu0 0.0
        %1589 = vmatprep.subr.mxu0 0.0
        %1590 = vmatpush1.msra.mxu0 0.0
        %1591 = vmatprep.subr.mxu0 0.0
        %1592 = vmatpush1.msra.mxu0 0.0
        %1593 = vmatprep.subr.mxu0 0.0
        %1594 = vmatpush1.msra.mxu0 0.0
        %1595 = vmatprep.subr.mxu0 0.0
        %1596 = vmatpush1.msra.mxu0 0.0
        %1597 = vmatprep.subr.mxu0 0.0
        %1598 = vmatpush1.msra.mxu0 0.0
        %1599 = vmatprep.subr.mxu0 0.0
        %1600 = vmatpush1.msra.mxu0 0.0
        %1601 = vmatprep.subr.mxu0 0.0
        %1602 = vmatpush1.msra.mxu0 0.0
        %1603 = vmatprep.subr.mxu0 0.0
        %1604 = vmatpush1.msra.mxu0 0.0
        %1605 = vmatprep.subr.mxu0 0.0
        %1606 = vmatpush1.msra.mxu0 0.0
        %1607 = vmatprep.subr.mxu0 0.0
        %1608 = vmatpush1.msra.mxu0 0.0
        %1609 = vmatprep.subr.mxu0 0.0
        %1610 = vmatpush1.msra.mxu0 0.0
        %1611 = vmatprep.subr.mxu0 0.0
        %1612 = vmatpush1.msra.mxu0 0.0
        %1613 = vmatprep.subr.mxu0 0.0
        %1614 = vmatpush1.msra.mxu0 0.0
        %1615 = vmatprep.subr.mxu0 0.0
        %1616 = vmatpush1.msra.mxu0 0.0
        %1617 = vmatprep.mubr.f32.mxu0 0.0
        %1618 = vmatmul.mubr.f32.gmra.mrb[0].mxu0 %v1551
        %v1619 = vpop.f32.mrb[0].mxu0
        %v1620 = vadd.f32 0.0, %v1619
        %v1621 = vpop.f32.mrb[0].mxu0
        %v1622 = vadd.f32 0.0, %v1621
        %1623 = vdwg.mxu0
        %v1624 = vadd.f32 %v1542, %v1620
        %v1625 = vadd.f32 %v1543, %v1622
        %1626 = vrot.lane.b32.xlu0 %v1192, 127
        %v1627 = vpop.permute.xlu0 %1626
        %1628 = vrot.lane.b32.xlu0 %v1193, 127
        %v1629 = vpop.permute.xlu0 %1628
        %v1630 = vsel %vm756, %v1627, %v1629
        %v1633 = vsel %vm756, %v1629, 0.0
        %v1634 = vmul.f32 %v1630, %v767
        %v1635 = vmul.f32 %v1633, %v771
        %s1636 = scalar_lea.vmem %s3, 20
        %v1637 = vld [vmem:[%s1636] sm:$0xf]
        %v1639 = vsel %vm1219, %v1637, 0
        %1641 = vmatprep.subr.mxu0 %v1635
        %1642 = vmatpush1.msra.mxu0 %v1634
        %1643 = vmatprep.subr.mxu0 0.0
        %1644 = vmatpush1.msra.mxu0 0.0
        %1645 = vmatprep.subr.mxu0 0.0
        %1646 = vmatpush1.msra.mxu0 0.0
        %1647 = vmatprep.subr.mxu0 0.0
        %1648 = vmatpush1.msra.mxu0 0.0
        %1649 = vmatprep.subr.mxu0 0.0
        %1650 = vmatpush1.msra.mxu0 0.0
        %1651 = vmatprep.subr.mxu0 0.0
        %1652 = vmatpush1.msra.mxu0 0.0
        %1653 = vmatprep.subr.mxu0 0.0
        %1654 = vmatpush1.msra.mxu0 0.0
        %1655 = vmatprep.subr.mxu0 0.0
        %1656 = vmatpush1.msra.mxu0 0.0
        %1657 = vmatprep.subr.mxu0 0.0
        %1658 = vmatpush1.msra.mxu0 0.0
        %1659 = vmatprep.subr.mxu0 0.0
        %1660 = vmatpush1.msra.mxu0 0.0
        %1661 = vmatprep.subr.mxu0 0.0
        %1662 = vmatpush1.msra.mxu0 0.0
        %1663 = vmatprep.subr.mxu0 0.0
        %1664 = vmatpush1.msra.mxu0 0.0
        %1665 = vmatprep.subr.mxu0 0.0
        %1666 = vmatpush1.msra.mxu0 0.0
        %1667 = vmatprep.subr.mxu0 0.0
        %1668 = vmatpush1.msra.mxu0 0.0
        %1669 = vmatprep.subr.mxu0 0.0
        %1670 = vmatpush1.msra.mxu0 0.0
        %1671 = vmatprep.subr.mxu0 0.0
        %1672 = vmatpush1.msra.mxu0 0.0
        %1673 = vmatprep.subr.mxu0 0.0
        %1674 = vmatpush1.msra.mxu0 0.0
        %1675 = vmatprep.subr.mxu0 0.0
        %1676 = vmatpush1.msra.mxu0 0.0
        %1677 = vmatprep.subr.mxu0 0.0
        %1678 = vmatpush1.msra.mxu0 0.0
        %1679 = vmatprep.subr.mxu0 0.0
        %1680 = vmatpush1.msra.mxu0 0.0
        %1681 = vmatprep.subr.mxu0 0.0
        %1682 = vmatpush1.msra.mxu0 0.0
        %1683 = vmatprep.subr.mxu0 0.0
        %1684 = vmatpush1.msra.mxu0 0.0
        %1685 = vmatprep.subr.mxu0 0.0
        %1686 = vmatpush1.msra.mxu0 0.0
        %1687 = vmatprep.subr.mxu0 0.0
        %1688 = vmatpush1.msra.mxu0 0.0
        %1689 = vmatprep.subr.mxu0 0.0
        %1690 = vmatpush1.msra.mxu0 0.0
        %1691 = vmatprep.subr.mxu0 0.0
        %1692 = vmatpush1.msra.mxu0 0.0
        %1693 = vmatprep.subr.mxu0 0.0
        %1694 = vmatpush1.msra.mxu0 0.0
        %1695 = vmatprep.subr.mxu0 0.0
        %1696 = vmatpush1.msra.mxu0 0.0
        %1697 = vmatprep.subr.mxu0 0.0
        %1698 = vmatpush1.msra.mxu0 0.0
        %1699 = vmatprep.subr.mxu0 0.0
        %1700 = vmatpush1.msra.mxu0 0.0
        %1701 = vmatprep.subr.mxu0 0.0
        %1702 = vmatpush1.msra.mxu0 0.0
        %1703 = vmatprep.subr.mxu0 0.0
        %1704 = vmatpush1.msra.mxu0 0.0
        %1705 = vmatprep.mubr.f32.mxu0 0.0
        %1706 = vmatmul.mubr.f32.gmra.mrb[0].mxu0 %v1639
        %v1707 = vpop.f32.mrb[0].mxu0
        %v1708 = vadd.f32 0.0, %v1707
        %v1709 = vpop.f32.mrb[0].mxu0
        %v1710 = vadd.f32 0.0, %v1709
        %1711 = vdwg.mxu0
        %v1712 = vadd.f32 %v1624, %v1708
        %v1713 = vadd.f32 %v1625, %v1710
        %1714 = vrot.lane.b32.xlu0 %v1192, 113
        %v1715 = vpop.permute.xlu0 %1714
        %1716 = vrot.lane.b32.xlu0 %v1193, 113
        %v1717 = vpop.permute.xlu0 %1716
        %v1718 = vsel %vm864, %v1715, %v1717
        %v1721 = vsel %vm864, %v1717, 0.0
        %v1722 = vmul.f32 %v1718, %v875
        %v1723 = vmul.f32 %v1721, %v879
        %s1724 = scalar_lea.vmem %s3, 24
        %v1725 = vld [vmem:[%s1724] sm:$0xf]
        %v1727 = vsel %vm1219, %v1725, 0
        %1729 = vmatprep.subr.mxu0 %v1723
        %1730 = vmatpush1.msra.mxu0 %v1722
        %1731 = vmatprep.subr.mxu0 0.0
        %1732 = vmatpush1.msra.mxu0 0.0
        %1733 = vmatprep.subr.mxu0 0.0
        %1734 = vmatpush1.msra.mxu0 0.0
        %1735 = vmatprep.subr.mxu0 0.0
        %1736 = vmatpush1.msra.mxu0 0.0
        %1737 = vmatprep.subr.mxu0 0.0
        %1738 = vmatpush1.msra.mxu0 0.0
        %1739 = vmatprep.subr.mxu0 0.0
        %1740 = vmatpush1.msra.mxu0 0.0
        %1741 = vmatprep.subr.mxu0 0.0
        %1742 = vmatpush1.msra.mxu0 0.0
        %1743 = vmatprep.subr.mxu0 0.0
        %1744 = vmatpush1.msra.mxu0 0.0
        %1745 = vmatprep.subr.mxu0 0.0
        %1746 = vmatpush1.msra.mxu0 0.0
        %1747 = vmatprep.subr.mxu0 0.0
        %1748 = vmatpush1.msra.mxu0 0.0
        %1749 = vmatprep.subr.mxu0 0.0
        %1750 = vmatpush1.msra.mxu0 0.0
        %1751 = vmatprep.subr.mxu0 0.0
        %1752 = vmatpush1.msra.mxu0 0.0
        %1753 = vmatprep.subr.mxu0 0.0
        %1754 = vmatpush1.msra.mxu0 0.0
        %1755 = vmatprep.subr.mxu0 0.0
        %1756 = vmatpush1.msra.mxu0 0.0
        %1757 = vmatprep.subr.mxu0 0.0
        %1758 = vmatpush1.msra.mxu0 0.0
        %1759 = vmatprep.subr.mxu0 0.0
        %1760 = vmatpush1.msra.mxu0 0.0
        %1761 = vmatprep.subr.mxu0 0.0
        %1762 = vmatpush1.msra.mxu0 0.0
        %1763 = vmatprep.subr.mxu0 0.0
        %1764 = vmatpush1.msra.mxu0 0.0
        %1765 = vmatprep.subr.mxu0 0.0
        %1766 = vmatpush1.msra.mxu0 0.0
        %1767 = vmatprep.subr.mxu0 0.0
        %1768 = vmatpush1.msra.mxu0 0.0
        %1769 = vmatprep.subr.mxu0 0.0
        %1770 = vmatpush1.msra.mxu0 0.0
        %1771 = vmatprep.subr.mxu0 0.0
        %1772 = vmatpush1.msra.mxu0 0.0
        %1773 = vmatprep.subr.mxu0 0.0
        %1774 = vmatpush1.msra.mxu0 0.0
        %1775 = vmatprep.subr.mxu0 0.0
        %1776 = vmatpush1.msra.mxu0 0.0
        %1777 = vmatprep.subr.mxu0 0.0
        %1778 = vmatpush1.msra.mxu0 0.0
        %1779 = vmatprep.subr.mxu0 0.0
        %1780 = vmatpush1.msra.mxu0 0.0
        %1781 = vmatprep.subr.mxu0 0.0
        %1782 = vmatpush1.msra.mxu0 0.0
        %1783 = vmatprep.subr.mxu0 0.0
        %1784 = vmatpush1.msra.mxu0 0.0
        %1785 = vmatprep.subr.mxu0 0.0
        %1786 = vmatpush1.msra.mxu0 0.0
        %1787 = vmatprep.subr.mxu0 0.0
        %1788 = vmatpush1.msra.mxu0 0.0
        %1789 = vmatprep.subr.mxu0 0.0
        %1790 = vmatpush1.msra.mxu0 0.0
        %1791 = vmatprep.subr.mxu0 0.0
        %1792 = vmatpush1.msra.mxu0 0.0
        %1793 = vmatprep.mubr.f32.mxu0 0.0
        %1794 = vmatmul.mubr.f32.gmra.mrb[0].mxu0 %v1727
        %v1795 = vpop.f32.mrb[0].mxu0
        %v1796 = vadd.f32 0.0, %v1795
        %v1797 = vpop.f32.mrb[0].mxu0
        %v1798 = vadd.f32 0.0, %v1797
        %1799 = vdwg.mxu0
        %v1800 = vadd.f32 %v1712, %v1796
        %v1801 = vadd.f32 %v1713, %v1798
        %1802 = vrot.lane.b32.xlu0 %v1192, 112
        %v1803 = vpop.permute.xlu0 %1802
        %1804 = vrot.lane.b32.xlu0 %v1193, 112
        %v1805 = vpop.permute.xlu0 %1804
        %v1806 = vsel %vm972, %v1803, %v1805
        %v1809 = vsel %vm972, %v1805, 0.0
        %v1810 = vmul.f32 %v1806, %v983
        %v1811 = vmul.f32 %v1809, %v987
        %s1812 = scalar_lea.vmem %s3, 28
        %v1813 = vld [vmem:[%s1812] sm:$0xf]
        %v1815 = vsel %vm1219, %v1813, 0
        %1817 = vmatprep.subr.mxu0 %v1811
        %1818 = vmatpush1.msra.mxu0 %v1810
        %1819 = vmatprep.subr.mxu0 0.0
        %1820 = vmatpush1.msra.mxu0 0.0
        %1821 = vmatprep.subr.mxu0 0.0
        %1822 = vmatpush1.msra.mxu0 0.0
        %1823 = vmatprep.subr.mxu0 0.0
        %1824 = vmatpush1.msra.mxu0 0.0
        %1825 = vmatprep.subr.mxu0 0.0
        %1826 = vmatpush1.msra.mxu0 0.0
        %1827 = vmatprep.subr.mxu0 0.0
        %1828 = vmatpush1.msra.mxu0 0.0
        %1829 = vmatprep.subr.mxu0 0.0
        %1830 = vmatpush1.msra.mxu0 0.0
        %1831 = vmatprep.subr.mxu0 0.0
        %1832 = vmatpush1.msra.mxu0 0.0
        %1833 = vmatprep.subr.mxu0 0.0
        %1834 = vmatpush1.msra.mxu0 0.0
        %1835 = vmatprep.subr.mxu0 0.0
        %1836 = vmatpush1.msra.mxu0 0.0
        %1837 = vmatprep.subr.mxu0 0.0
        %1838 = vmatpush1.msra.mxu0 0.0
        %1839 = vmatprep.subr.mxu0 0.0
        %1840 = vmatpush1.msra.mxu0 0.0
        %1841 = vmatprep.subr.mxu0 0.0
        %1842 = vmatpush1.msra.mxu0 0.0
        %1843 = vmatprep.subr.mxu0 0.0
        %1844 = vmatpush1.msra.mxu0 0.0
        %1845 = vmatprep.subr.mxu0 0.0
        %1846 = vmatpush1.msra.mxu0 0.0
        %1847 = vmatprep.subr.mxu0 0.0
        %1848 = vmatpush1.msra.mxu0 0.0
        %1849 = vmatprep.subr.mxu0 0.0
        %1850 = vmatpush1.msra.mxu0 0.0
        %1851 = vmatprep.subr.mxu0 0.0
        %1852 = vmatpush1.msra.mxu0 0.0
        %1853 = vmatprep.subr.mxu0 0.0
        %1854 = vmatpush1.msra.mxu0 0.0
        %1855 = vmatprep.subr.mxu0 0.0
        %1856 = vmatpush1.msra.mxu0 0.0
        %1857 = vmatprep.subr.mxu0 0.0
        %1858 = vmatpush1.msra.mxu0 0.0
        %1859 = vmatprep.subr.mxu0 0.0
        %1860 = vmatpush1.msra.mxu0 0.0
        %1861 = vmatprep.subr.mxu0 0.0
        %1862 = vmatpush1.msra.mxu0 0.0
        %1863 = vmatprep.subr.mxu0 0.0
        %1864 = vmatpush1.msra.mxu0 0.0
        %1865 = vmatprep.subr.mxu0 0.0
        %1866 = vmatpush1.msra.mxu0 0.0
        %1867 = vmatprep.subr.mxu0 0.0
        %1868 = vmatpush1.msra.mxu0 0.0
        %1869 = vmatprep.subr.mxu0 0.0
        %1870 = vmatpush1.msra.mxu0 0.0
        %1871 = vmatprep.subr.mxu0 0.0
        %1872 = vmatpush1.msra.mxu0 0.0
        %1873 = vmatprep.subr.mxu0 0.0
        %1874 = vmatpush1.msra.mxu0 0.0
        %1875 = vmatprep.subr.mxu0 0.0
        %1876 = vmatpush1.msra.mxu0 0.0
        %1877 = vmatprep.subr.mxu0 0.0
        %1878 = vmatpush1.msra.mxu0 0.0
        %1879 = vmatprep.subr.mxu0 0.0
        %1880 = vmatpush1.msra.mxu0 0.0
        %1881 = vmatprep.mubr.f32.mxu0 0.0
        %1882 = vmatmul.mubr.f32.gmra.mrb[0].mxu0 %v1815
        %v1883 = vpop.f32.mrb[0].mxu0
        %v1884 = vadd.f32 0.0, %v1883
        %v1885 = vpop.f32.mrb[0].mxu0
        %v1886 = vadd.f32 0.0, %v1885
        %1887 = vdwg.mxu0
        %v1888 = vadd.f32 %v1800, %v1884
        %v1889 = vadd.f32 %v1801, %v1886
        %1890 = vrot.lane.b32.xlu0 %v1192, 111
        %v1891 = vpop.permute.xlu0 %1890
        %1892 = vrot.lane.b32.xlu0 %v1193, 111
        %v1893 = vpop.permute.xlu0 %1892
        %v1894 = vsel %vm1080, %v1891, %v1893
        %v1897 = vsel %vm1080, %v1893, 0.0
        %v1898 = vmul.f32 %v1894, %v1091
        %v1899 = vmul.f32 %v1897, %v1095
        %s1900 = scalar_lea.vmem %s3, 32
        %v1901 = vld [vmem:[%s1900] sm:$0xf]
        %v1903 = vsel %vm1219, %v1901, 0
        %1905 = vmatprep.subr.mxu0 %v1899
        %1906 = vmatpush1.msra.mxu0 %v1898
        %1907 = vmatprep.subr.mxu0 0.0
        %1908 = vmatpush1.msra.mxu0 0.0
        %1909 = vmatprep.subr.mxu0 0.0
        %1910 = vmatpush1.msra.mxu0 0.0
        %1911 = vmatprep.subr.mxu0 0.0
        %1912 = vmatpush1.msra.mxu0 0.0
        %1913 = vmatprep.subr.mxu0 0.0
        %1914 = vmatpush1.msra.mxu0 0.0
        %1915 = vmatprep.subr.mxu0 0.0
        %1916 = vmatpush1.msra.mxu0 0.0
        %1917 = vmatprep.subr.mxu0 0.0
        %1918 = vmatpush1.msra.mxu0 0.0
        %1919 = vmatprep.subr.mxu0 0.0
        %1920 = vmatpush1.msra.mxu0 0.0
        %1921 = vmatprep.subr.mxu0 0.0
        %1922 = vmatpush1.msra.mxu0 0.0
        %1923 = vmatprep.subr.mxu0 0.0
        %1924 = vmatpush1.msra.mxu0 0.0
        %1925 = vmatprep.subr.mxu0 0.0
        %1926 = vmatpush1.msra.mxu0 0.0
        %1927 = vmatprep.subr.mxu0 0.0
        %1928 = vmatpush1.msra.mxu0 0.0
        %1929 = vmatprep.subr.mxu0 0.0
        %1930 = vmatpush1.msra.mxu0 0.0
        %1931 = vmatprep.subr.mxu0 0.0
        %1932 = vmatpush1.msra.mxu0 0.0
        %1933 = vmatprep.subr.mxu0 0.0
        %1934 = vmatpush1.msra.mxu0 0.0
        %1935 = vmatprep.subr.mxu0 0.0
        %1936 = vmatpush1.msra.mxu0 0.0
        %1937 = vmatprep.subr.mxu0 0.0
        %1938 = vmatpush1.msra.mxu0 0.0
        %1939 = vmatprep.subr.mxu0 0.0
        %1940 = vmatpush1.msra.mxu0 0.0
        %1941 = vmatprep.subr.mxu0 0.0
        %1942 = vmatpush1.msra.mxu0 0.0
        %1943 = vmatprep.subr.mxu0 0.0
        %1944 = vmatpush1.msra.mxu0 0.0
        %1945 = vmatprep.subr.mxu0 0.0
        %1946 = vmatpush1.msra.mxu0 0.0
        %1947 = vmatprep.subr.mxu0 0.0
        %1948 = vmatpush1.msra.mxu0 0.0
        %1949 = vmatprep.subr.mxu0 0.0
        %1950 = vmatpush1.msra.mxu0 0.0
        %1951 = vmatprep.subr.mxu0 0.0
        %1952 = vmatpush1.msra.mxu0 0.0
        %1953 = vmatprep.subr.mxu0 0.0
        %1954 = vmatpush1.msra.mxu0 0.0
        %1955 = vmatprep.subr.mxu0 0.0
        %1956 = vmatpush1.msra.mxu0 0.0
        %1957 = vmatprep.subr.mxu0 0.0
        %1958 = vmatpush1.msra.mxu0 0.0
        %1959 = vmatprep.subr.mxu0 0.0
        %1960 = vmatpush1.msra.mxu0 0.0
        %1961 = vmatprep.subr.mxu0 0.0
        %1962 = vmatpush1.msra.mxu0 0.0
        %1963 = vmatprep.subr.mxu0 0.0
        %1964 = vmatpush1.msra.mxu0 0.0
        %1965 = vmatprep.subr.mxu0 0.0
        %1966 = vmatpush1.msra.mxu0 0.0
        %1967 = vmatprep.subr.mxu0 0.0
        %1968 = vmatpush1.msra.mxu0 0.0
        %1969 = vmatprep.mubr.f32.mxu0 0.0
        %1970 = vmatmul.mubr.f32.gmra.mrb[0].mxu0 %v1903
        %v1971 = vpop.f32.mrb[0].mxu0
        %v1972 = vadd.f32 0.0, %v1971
        %v1973 = vpop.f32.mrb[0].mxu0
        %v1974 = vadd.f32 0.0, %v1973
        %1975 = vdwg.mxu0
        %v1976 = vadd.f32 %v1888, %v1972
        %v1977 = vadd.f32 %v1889, %v1974
        %v1978 = vmul.f32 %v1976, 2.0
        %v1979 = vmul.f32 %v1977, 2.0
        %v1982 = vcombine.low %v1978, %v1979
        %v1984 = vsub.f32 %v223, %v1982
        %1985 = vst [vmem:[%s217] sm:$0xff] %v1984
        %s1986 = sand.u32 %s137, 1
        %s1987 = scalar_lea.sflag [#allocation3], %s1986
        %s1988 = sand.u32 %s137, 1
        %s1989 = smul.addr %s1988, 8
        %s1990 = scalar_lea.vmem [#allocation2], %s1989
        // Predicated region
        $region41: #{tpu_custom_call.1} parent=39 // pred_check
          %p1991 = pneg %p147
        $region42: #{tpu_custom_call.1} parent=39 // pred_check_branch
          %1993 = sbr.rel (%p1991) target = $region44
        $region43: #{tpu_custom_call.1} parent=39 // pred_region
          %s1995 = ssub.s32 128, 128
          %1996 = vsyncadd %s1987, %s1995
          %s1997 = smul.addr %s19, 2
          %s1998 = smul.addr %s1997, 64
          %s1999 = scalar_lea.hbm %s5, %s1998
          %s2001 = sshll.u32 %s1990, 4
          %s2002 = int_to_ptr.vmem [resolvable:$true] %s2001
          %2004 = dma.vmem_to_hbm [thread:$0]  %s2002, 128, %s1999, %s1987
        $region44: #{tpu_custom_call.1} parent=39 // pred_fallthru
          _
      $region40: #{tpu_custom_call.1} parent=5 // pred_fallthru
        _
      %p2005 = scmp.le.s32.totalorder 2, %s14
      // Predicated region
      $region45: #{tpu_custom_call.1} parent=5 // pred_check
        %p2006 = pneg %p2005
      $region46: #{tpu_custom_call.1} parent=5 // pred_check_branch
        %2008 = sbr.rel (%p2006) target = $region48
      $region47: #{tpu_custom_call.1} parent=5 // pred_region
        %s2009 = ssub.s32 %s14, 2
        // Predicated region
        $region49: #{tpu_custom_call.1} parent=47 // pred_check
          %p2010 = pneg %p153
        $region50: #{tpu_custom_call.1} parent=47 // pred_check_branch
          %2012 = sbr.rel (%p2010) target = $region52
        $region51: #{tpu_custom_call.1} parent=47 // pred_region
          %s2013 = sand.u32 %s138, 1
          %s2014 = scalar_lea.sflag [#allocation3], %s2013
          %s2015 = sand.u32 %s138, 1
          %s2016 = smul.addr %s2015, 8
          %s2017 = scalar_lea.vmem [#allocation2], %s2016
          %2018 = dma.done %s2014, 128
        $region52: #{tpu_custom_call.1} parent=47 // pred_fallthru
          _
      $region48: #{tpu_custom_call.1} parent=5 // pred_fallthru
        _
    $region6: #{tpu_custom_call.1} parent=1 // loop_footer
      %s18 = sadd.s32 1, %s14
    $region7: #{tpu_custom_call.1} parent=1 // loop_footer_branch
      %13 = sbr.rel target = $region3
    $region8: #{tpu_custom_call.1} parent=1 // loop_exit
      _
    %2019 = vsyncpa [#allocation3], 1
    %s2020 = scalar_lea.sflag [#allocation3], 1
    %2021 = vsyncpa %s2020, 1

</llo_original>
